<compile_context>
chip_gen: v7x
topology: tpu7x:2x2x1
jax: 0.10.0
libtpu: 0.0.40
codegen_flags: <defaults>
</compile_context>

<pallas_src>
import jax
import jax.numpy as jnp
import numpy as np
from jax.experimental import pallas as pl
from jax.experimental.pallas import tpu as pltpu


_TARGET_GRID_STEPS = 8          # >= 4 steps per TensorCore on dual-core (v7x) parts


def _vmem_capacity_bytes():
    """Per-core VMEM capacity; conservative fallback if the query is unavailable."""
    try:
        return int(pltpu.get_tpu_info().vmem_capacity_bytes)
    except Exception:
        return 64 * 1024 * 1024          # v7x per-TensorCore VMEM (smallest generation)


def _bytes_per_image(H, W, C_in, C_out):
    """Approximate per-image VMEM footprint of one grid step (everything resident)."""
    pix_in = (H + 2) * (W + 2) * C_in
    pix_out = (H + 2) * (W + 2) * C_out
    return (
        2 * pix_in * 2            # double-buffered bf16 input block (pad over-counts)
        + pix_in * 2              # in-register 1-px-padded copy of x (bf16)
        + 2 * pix_out * 4         # double-buffered f32 output block
        + H * W * (C_in * (4 + 2) + C_out * (4 + 4))   # worst-case strip temporaries
    )


def _pick_strip_h(H, W, C_in, C_out, block_n, cap_bytes=4 * 1024 * 1024):
    """Largest divisor of H whose per-strip temporaries stay under cap_bytes."""
    per_row = block_n * (W + 2) * (C_in * (4 + 2) + C_out * (4 + 4))
    strip_h = 1
    for s in range(H, 0, -1):
        if H % s == 0:
            strip_h = s
            if s * per_row <= cap_bytes:
                break
    return strip_h


def _make_dsconv_kernel(strip_h):
    """Kernel factory; strip_h (a divisor of H) is baked in statically."""

    def kernel(x_ref, dw_w_ref, pw_w_ref, pw_b_ref, out_ref):
        # x_ref    : (nb, H, W, C_in)        bf16 NHWC input block (unpadded)
        # dw_w_ref : (3, 3, C_in)            f32 depthwise weights
        # pw_w_ref : (C_in, C_out)           bf16 pointwise weights
        # pw_b_ref : (1, C_out)              f32 folded bias  dw_b @ pw_w
        # out_ref  : (nb, H+2, W+2, C_out)   f32 ReLU(pw(dw(x))) incl. padding=1 ring
        nb, H, W, C_in = x_ref.shape
        C_out = out_ref.shape[3]
        num_strips = H // strip_h

        # ---- stage x with a 1-px zero halo, built in registers (no scratch ref,
        #      no W-offset partial stores, no staging copy) ----
        x = x_ref[...]                                          # (nb, H, W, C_in) bf16
        zc = jnp.zeros((nb, H, 1, C_in), x.dtype)
        xw = jnp.concatenate([zc, x, zc], axis=2)               # (nb, H, W+2, C_in)
        zr = jnp.zeros((nb, 1, W + 2, C_in), x.dtype)
        xpad = jnp.concatenate([zr, xw, zr], axis=1)            # (nb, H+2, W+2, C_in)

        dw_w = dw_w_ref[...].astype(jnp.float32)                # (3, 3, C_in)
        pw_w = pw_w_ref[...]                                    # (C_in, C_out) bf16
        pw_b = pw_b_ref[...]                                    # (1, C_out)    f32

        # The pointwise conv's padding=1 ring is exactly ReLU(0) = 0: emit it as two
        # full-width row stores (top/bottom); the left/right zero columns are folded
        # into the per-strip row slabs below, so every store is W-aligned.
        zrow = jnp.zeros((nb, 1, W + 2, C_out), out_ref.dtype)
        out_ref[:, 0:1, :, :] = zrow
        out_ref[:, H + 1:H + 2, :, :] = zrow

        for s in range(num_strips):
            r0 = s * strip_h
            xs = xpad[:, r0:r0 + strip_h + 2, :, :]             # (nb, sh+2, W+2, C_in)

            # depthwise 3x3: 9 shifted multiply-accumulates, f32 accumulation (VPU)
            acc = None
            for kh in range(3):
                for kw in range(3):
                    tap = xs[:, kh:kh + strip_h, kw:kw + W, :].astype(jnp.float32)
                    tap = tap * dw_w[kh, kw, :]
                    acc = tap if acc is None else acc + tap     # (nb, sh, W, C_in)

            # pointwise 1x1: MXU matmul (bf16 operands, f32 accumulation) with the
            # depthwise bias folded through the bias-free pointwise conv, then ReLU.
            lhs = acc.reshape(nb * strip_h * W, C_in).astype(jnp.bfloat16)
            y = jnp.dot(lhs, pw_w, preferred_element_type=jnp.float32)
            y = jnp.maximum(y + pw_b, 0.0)
            y = y.reshape(nb, strip_h, W, C_out)

            # fold the left/right zero columns in registers and store one contiguous,
            # full-width row slab per strip (H offset only -> unmasked stores).
            zc_o = jnp.zeros((nb, strip_h, 1, C_out), y.dtype)
            y_wide = jnp.concatenate([zc_o, y, zc_o], axis=2).astype(out_ref.dtype)
            out_ref[:, 1 + r0:1 + r0 + strip_h, :, :] = y_wide

    return kernel


def depth_sep_conv_nhwc(x_nhwc, dw_w_pt, dw_b_pt, pw_w_pt):
    """NHWC forward pass. x_nhwc: (N, H, W, C_in); returns (N, H+2, W+2, C_out) f32."""
    N, H, W, C_in = x_nhwc.shape
    C_out = pw_w_pt.shape[0]

    # ---- VMEM-budget-aware tiling ------------------------------------------------
    vmem_cap = _vmem_capacity_bytes()
    vmem_limit = min(vmem_cap * 3 // 4, 100 * 1024 * 1024)   # ~48 MiB v7x, ~96 MiB v5e/v6e
    per_image = _bytes_per_image(H, W, C_in, C_out)
    by_budget = max(1, (vmem_limit // 2) // per_image)       # keep the pipeline spill-free
    by_depth = max(1, N // _TARGET_GRID_STEPS)               # keep >= ~8 grid steps if possible
    block_n = max(1, min(by_budget, by_depth, N))
    while N % block_n:                                       # fall back to a divisor of N
        block_n -= 1
    grid_n = N // block_n
    strip_h = _pick_strip_h(H, W, C_in, C_out, block_n)

    # ---- tiny parameter repacking (plain JAX) -------------------------------------
    x = x_nhwc.astype(jnp.bfloat16)                                   # halve the HBM read
    dw_w = jnp.transpose(dw_w_pt[:, 0, :, :], (1, 2, 0)).astype(jnp.float32)   # (3,3,C_in)
    pw_w = jnp.transpose(pw_w_pt[:, :, 0, 0], (1, 0)).astype(jnp.float32)      # (C_in,C_out)
    # depthwise bias folded through the (linear, bias-free) pointwise conv, in f32
    pw_b = dw_b_pt.reshape(1, C_in).astype(jnp.float32) @ pw_w                 # (1, C_out)
    pw_w_bf16 = pw_w.astype(jnp.bfloat16)

    # TODO(synk): for C_out < 128 a lane-dense (nb, H+2, (W+2)*C_out) output layout (and a
    # VPU pointwise path for C_in/C_out < ~32) would further cut masked stores; skipped here.
    out = pl.pallas_call(
        _make_dsconv_kernel(strip_h),
        out_shape=jax.ShapeDtypeStruct((N, H + 2, W + 2, C_out), jnp.float32),
        grid_spec=pltpu.PrefetchScalarGridSpec(
            num_scalar_prefetch=0,
            grid=(grid_n,),
            in_specs=[
                pl.BlockSpec((block_n, H, W, C_in), lambda n: (n, 0, 0, 0)),
                pl.BlockSpec((3, 3, C_in), lambda n: (0, 0, 0)),
                pl.BlockSpec((C_in, C_out), lambda n: (0, 0)),
                pl.BlockSpec((1, C_out), lambda n: (0, 0)),
            ],
            out_specs=pl.BlockSpec((block_n, H + 2, W + 2, C_out),
                                   lambda n: (n, 0, 0, 0)),
        ),
        compiler_params=pltpu.CompilerParams(
            dimension_semantics=("parallel",),
            vmem_limit_bytes=vmem_limit,
        ),
    )(x, dw_w, pw_w_bf16, pw_b)
    return out


def depth_sep_conv(x_nchw, dw_w_pt, dw_b_pt, pw_w_pt):
    """NCHW (PyTorch-layout) entry point. Returns (N, C_out, H+2, W+2) f32.

    The two transposes exist only for PyTorch-layout parity; callers that keep
    activations NHWC should call depth_sep_conv_nhwc directly and skip both full
    HBM round trips.
    """
    x_nhwc = jnp.transpose(x_nchw, (0, 2, 3, 1))
    out = depth_sep_conv_nhwc(x_nhwc, dw_w_pt, dw_b_pt, pw_w_pt)
    return jnp.transpose(out, (0, 3, 1, 2))


def _reference(x_nchw, dw_w_pt, dw_b_pt, pw_w_pt):
    """Pure-JAX reference mirroring nn.Conv2d exactly (for validation)."""
    C_in = x_nchw.shape[1]
    y = jax.lax.conv_general_dilated(
        x_nchw, dw_w_pt, window_strides=(1, 1), padding=((1, 1), (1, 1)),
        dimension_numbers=("NCHW", "OIHW", "NCHW"), feature_group_count=C_in)
    y = y + dw_b_pt[None, :, None, None]
    z = jax.lax.conv_general_dilated(
        y, pw_w_pt, window_strides=(1, 1), padding=((1, 1), (1, 1)),
        dimension_numbers=("NCHW", "OIHW", "NCHW"))
    return jnp.maximum(z, 0.0)


if __name__ == "__main__":
    N, C_in, C_out, H, W = 2, 4, 8, 16, 16

    key = jax.random.PRNGKey(0)
    k_x, k_dw, k_db, k_pw = jax.random.split(key, 4)
    x = jax.random.normal(k_x, (N, C_in, H, W), jnp.float32)
    # Deterministic synthetic parameters, shapes as in the module's __init__:
    dw_w = 0.1 * jax.random.normal(k_dw, (C_in, 1, 3, 3), jnp.float32)      # conv_dw.weight
    dw_b = 0.1 * jax.random.normal(k_db, (C_in,), jnp.float32)              # conv_dw.bias
    pw_w = 0.1 * jax.random.normal(k_pw, (C_out, C_in, 1, 1), jnp.float32)  # conv_pw.weight

    out = jax.block_until_ready(depth_sep_conv(x, dw_w, dw_b, pw_w))
    ref = jax.block_until_ready(_reference(x, dw_w, dw_b, pw_w))

    assert out.shape == (N, C_out, H + 2, W + 2), out.shape
    # bf16 activations + bf16 MXU operands in the pointwise matmul => relaxed tolerance.
    np.testing.assert_allclose(np.asarray(out), np.asarray(ref), rtol=5e-2, atol=1e-2)

    print("KERNEL_OK")
</pallas_src>

<mosaic_0001>
module attributes {stable_mosaic.version = 11 : i64} {
  func.func @kernel(%arg0: i32, %arg1: memref<1x16x16x4xbf16, #tpu.memory_space<vmem>>, %arg2: memref<3x3x4xf32, #tpu.memory_space<vmem>>, %arg3: memref<4x8xbf16, #tpu.memory_space<vmem>>, %arg4: memref<1x8xf32, #tpu.memory_space<vmem>>, %arg5: memref<1x18x18x8xf32, #tpu.memory_space<vmem>>) attributes {dimension_semantics = [#tpu.dimension_semantics<parallel>], iteration_bounds = array<i64: 2>, scalar_prefetch = 0 : i64, scratch_operands = 0 : i64, tpu.core_type = #tpu.core_type<tc>, window_params = [{transform_indices = @transform_0, window_bounds = array<i64: 1, 16, 16, 4>}, {pipeline_mode = #tpu.pipeline_mode<synchronous>, transform_indices = @transform_1, window_bounds = array<i64: 3, 3, 4>}, {pipeline_mode = #tpu.pipeline_mode<synchronous>, transform_indices = @transform_2, window_bounds = array<i64: 4, 8>}, {pipeline_mode = #tpu.pipeline_mode<synchronous>, transform_indices = @transform_3, window_bounds = array<i64: 1, 8>}, {transform_indices = @transform_4, window_bounds = array<i64: 1, 18, 18, 8>}]} {
    %c0 = arith.constant 0 : index
    %c0_0 = arith.constant 0 : index
    %c0_1 = arith.constant 0 : index
    %c0_2 = arith.constant 0 : index
    %0 = vector.load %arg1[%c0, %c0_0, %c0_1, %c0_2] : memref<1x16x16x4xbf16, #tpu.memory_space<vmem>>, vector<1x16x16x4xbf16>
    %cst = arith.constant 0.000000e+00 : bf16
    %1 = vector.broadcast %cst : bf16 to vector<1x16x1x4xbf16>
    %2 = tpu.concatenate %1, %0, %1 in 2 : vector<1x16x1x4xbf16>, vector<1x16x16x4xbf16>, vector<1x16x1x4xbf16> -> vector<1x16x18x4xbf16>
    %cst_3 = arith.constant 0.000000e+00 : bf16
    %3 = vector.broadcast %cst_3 : bf16 to vector<1x1x18x4xbf16>
    %4 = tpu.concatenate %3, %2, %3 in 1 : vector<1x1x18x4xbf16>, vector<1x16x18x4xbf16>, vector<1x1x18x4xbf16> -> vector<1x18x18x4xbf16>
    %c0_4 = arith.constant 0 : index
    %c0_5 = arith.constant 0 : index
    %c0_6 = arith.constant 0 : index
    %5 = vector.load %arg2[%c0_4, %c0_5, %c0_6] : memref<3x3x4xf32, #tpu.memory_space<vmem>>, vector<3x3x4xf32>
    %c0_7 = arith.constant 0 : index
    %c0_8 = arith.constant 0 : index
    %6 = vector.load %arg3[%c0_7, %c0_8] : memref<4x8xbf16, #tpu.memory_space<vmem>>, vector<4x8xbf16>
    %c0_9 = arith.constant 0 : index
    %c0_10 = arith.constant 0 : index
    %7 = vector.load %arg4[%c0_9, %c0_10] : memref<1x8xf32, #tpu.memory_space<vmem>>, vector<1x8xf32>
    %cst_11 = arith.constant 0.000000e+00 : f32
    %8 = vector.broadcast %cst_11 : f32 to vector<1x1x18x8xf32>
    %c0_12 = arith.constant 0 : index
    %c0_13 = arith.constant 0 : index
    %c0_14 = arith.constant 0 : index
    %c0_15 = arith.constant 0 : index
    %9 = vector.load %arg5[%c0_12, %c0_13, %c0_14, %c0_15] : memref<1x18x18x8xf32, #tpu.memory_space<vmem>>, vector<1x1x18x8xf32>
    tpu.vector_store %arg5[%c0_12, %c0_13, %c0_14, %c0_15], %8 {strides = array<i32>} : memref<1x18x18x8xf32, #tpu.memory_space<vmem>>, vector<1x1x18x8xf32>,
    %c0_16 = arith.constant 0 : index
    %c17 = arith.constant 17 : index
    %c0_17 = arith.constant 0 : index
    %c0_18 = arith.constant 0 : index
    %10 = vector.load %arg5[%c0_16, %c17, %c0_17, %c0_18] : memref<1x18x18x8xf32, #tpu.memory_space<vmem>>, vector<1x1x18x8xf32>
    tpu.vector_store %arg5[%c0_16, %c17, %c0_17, %c0_18], %8 {strides = array<i32>} : memref<1x18x18x8xf32, #tpu.memory_space<vmem>>, vector<1x1x18x8xf32>,
    %11 = vector.extract_strided_slice %4 {offsets = [0, 0, 0, 0], sizes = [1, 16, 16, 4], strides = [1, 1, 1, 1]} : vector<1x18x18x4xbf16> to vector<1x16x16x4xbf16>
    %12 = arith.extf %11 : vector<1x16x16x4xbf16> to vector<1x16x16x4xf32>
    %13 = vector.extract_strided_slice %5 {offsets = [0, 0, 0], sizes = [1, 1, 4], strides = [1, 1, 1]} : vector<3x3x4xf32> to vector<1x1x4xf32>
    %14 = vector.shape_cast %13 : vector<1x1x4xf32> to vector<4xf32>
    %15 = vector.shape_cast %14 : vector<4xf32> to vector<1x1x1x4xf32>
    %16 = vector.broadcast %15 : vector<1x1x1x4xf32> to vector<1x16x16x4xf32>
    %17 = arith.mulf %12, %16 : vector<1x16x16x4xf32>
    %18 = vector.extract_strided_slice %4 {offsets = [0, 0, 1, 0], sizes = [1, 16, 16, 4], strides = [1, 1, 1, 1]} : vector<1x18x18x4xbf16> to vector<1x16x16x4xbf16>
    %19 = arith.extf %18 : vector<1x16x16x4xbf16> to vector<1x16x16x4xf32>
    %20 = vector.extract_strided_slice %5 {offsets = [0, 1, 0], sizes = [1, 1, 4], strides = [1, 1, 1]} : vector<3x3x4xf32> to vector<1x1x4xf32>
    %21 = vector.shape_cast %20 : vector<1x1x4xf32> to vector<4xf32>
    %22 = vector.shape_cast %21 : vector<4xf32> to vector<1x1x1x4xf32>
    %23 = vector.broadcast %22 : vector<1x1x1x4xf32> to vector<1x16x16x4xf32>
    %24 = arith.mulf %19, %23 : vector<1x16x16x4xf32>
    %25 = arith.addf %17, %24 : vector<1x16x16x4xf32>
    %26 = vector.extract_strided_slice %4 {offsets = [0, 0, 2, 0], sizes = [1, 16, 16, 4], strides = [1, 1, 1, 1]} : vector<1x18x18x4xbf16> to vector<1x16x16x4xbf16>
    %27 = arith.extf %26 : vector<1x16x16x4xbf16> to vector<1x16x16x4xf32>
    %28 = vector.extract_strided_slice %5 {offsets = [0, 2, 0], sizes = [1, 1, 4], strides = [1, 1, 1]} : vector<3x3x4xf32> to vector<1x1x4xf32>
    %29 = vector.shape_cast %28 : vector<1x1x4xf32> to vector<4xf32>
    %30 = vector.shape_cast %29 : vector<4xf32> to vector<1x1x1x4xf32>
    %31 = vector.broadcast %30 : vector<1x1x1x4xf32> to vector<1x16x16x4xf32>
    %32 = arith.mulf %27, %31 : vector<1x16x16x4xf32>
    %33 = arith.addf %25, %32 : vector<1x16x16x4xf32>
    %34 = vector.extract_strided_slice %4 {offsets = [0, 1, 0, 0], sizes = [1, 16, 16, 4], strides = [1, 1, 1, 1]} : vector<1x18x18x4xbf16> to vector<1x16x16x4xbf16>
    %35 = arith.extf %34 : vector<1x16x16x4xbf16> to vector<1x16x16x4xf32>
    %36 = vector.extract_strided_slice %5 {offsets = [1, 0, 0], sizes = [1, 1, 4], strides = [1, 1, 1]} : vector<3x3x4xf32> to vector<1x1x4xf32>
    %37 = vector.shape_cast %36 : vector<1x1x4xf32> to vector<4xf32>
    %38 = vector.shape_cast %37 : vector<4xf32> to vector<1x1x1x4xf32>
    %39 = vector.broadcast %38 : vector<1x1x1x4xf32> to vector<1x16x16x4xf32>
    %40 = arith.mulf %35, %39 : vector<1x16x16x4xf32>
    %41 = arith.addf %33, %40 : vector<1x16x16x4xf32>
    %42 = vector.extract_strided_slice %4 {offsets = [0, 1, 1, 0], sizes = [1, 16, 16, 4], strides = [1, 1, 1, 1]} : vector<1x18x18x4xbf16> to vector<1x16x16x4xbf16>
    %43 = arith.extf %42 : vector<1x16x16x4xbf16> to vector<1x16x16x4xf32>
    %44 = vector.extract_strided_slice %5 {offsets = [1, 1, 0], sizes = [1, 1, 4], strides = [1, 1, 1]} : vector<3x3x4xf32> to vector<1x1x4xf32>
    %45 = vector.shape_cast %44 : vector<1x1x4xf32> to vector<4xf32>
    %46 = vector.shape_cast %45 : vector<4xf32> to vector<1x1x1x4xf32>
    %47 = vector.broadcast %46 : vector<1x1x1x4xf32> to vector<1x16x16x4xf32>
    %48 = arith.mulf %43, %47 : vector<1x16x16x4xf32>
    %49 = arith.addf %41, %48 : vector<1x16x16x4xf32>
    %50 = vector.extract_strided_slice %4 {offsets = [0, 1, 2, 0], sizes = [1, 16, 16, 4], strides = [1, 1, 1, 1]} : vector<1x18x18x4xbf16> to vector<1x16x16x4xbf16>
    %51 = arith.extf %50 : vector<1x16x16x4xbf16> to vector<1x16x16x4xf32>
    %52 = vector.extract_strided_slice %5 {offsets = [1, 2, 0], sizes = [1, 1, 4], strides = [1, 1, 1]} : vector<3x3x4xf32> to vector<1x1x4xf32>
    %53 = vector.shape_cast %52 : vector<1x1x4xf32> to vector<4xf32>
    %54 = vector.shape_cast %53 : vector<4xf32> to vector<1x1x1x4xf32>
    %55 = vector.broadcast %54 : vector<1x1x1x4xf32> to vector<1x16x16x4xf32>
    %56 = arith.mulf %51, %55 : vector<1x16x16x4xf32>
    %57 = arith.addf %49, %56 : vector<1x16x16x4xf32>
    %58 = vector.extract_strided_slice %4 {offsets = [0, 2, 0, 0], sizes = [1, 16, 16, 4], strides = [1, 1, 1, 1]} : vector<1x18x18x4xbf16> to vector<1x16x16x4xbf16>
    %59 = arith.extf %58 : vector<1x16x16x4xbf16> to vector<1x16x16x4xf32>
    %60 = vector.extract_strided_slice %5 {offsets = [2, 0, 0], sizes = [1, 1, 4], strides = [1, 1, 1]} : vector<3x3x4xf32> to vector<1x1x4xf32>
    %61 = vector.shape_cast %60 : vector<1x1x4xf32> to vector<4xf32>
    %62 = vector.shape_cast %61 : vector<4xf32> to vector<1x1x1x4xf32>
    %63 = vector.broadcast %62 : vector<1x1x1x4xf32> to vector<1x16x16x4xf32>
    %64 = arith.mulf %59, %63 : vector<1x16x16x4xf32>
    %65 = arith.addf %57, %64 : vector<1x16x16x4xf32>
    %66 = vector.extract_strided_slice %4 {offsets = [0, 2, 1, 0], sizes = [1, 16, 16, 4], strides = [1, 1, 1, 1]} : vector<1x18x18x4xbf16> to vector<1x16x16x4xbf16>
    %67 = arith.extf %66 : vector<1x16x16x4xbf16> to vector<1x16x16x4xf32>
    %68 = vector.extract_strided_slice %5 {offsets = [2, 1, 0], sizes = [1, 1, 4], strides = [1, 1, 1]} : vector<3x3x4xf32> to vector<1x1x4xf32>
    %69 = vector.shape_cast %68 : vector<1x1x4xf32> to vector<4xf32>
    %70 = vector.shape_cast %69 : vector<4xf32> to vector<1x1x1x4xf32>
    %71 = vector.broadcast %70 : vector<1x1x1x4xf32> to vector<1x16x16x4xf32>
    %72 = arith.mulf %67, %71 : vector<1x16x16x4xf32>
    %73 = arith.addf %65, %72 : vector<1x16x16x4xf32>
    %74 = vector.extract_strided_slice %4 {offsets = [0, 2, 2, 0], sizes = [1, 16, 16, 4], strides = [1, 1, 1, 1]} : vector<1x18x18x4xbf16> to vector<1x16x16x4xbf16>
    %75 = arith.extf %74 : vector<1x16x16x4xbf16> to vector<1x16x16x4xf32>
    %76 = vector.extract_strided_slice %5 {offsets = [2, 2, 0], sizes = [1, 1, 4], strides = [1, 1, 1]} : vector<3x3x4xf32> to vector<1x1x4xf32>
    %77 = vector.shape_cast %76 : vector<1x1x4xf32> to vector<4xf32>
    %78 = vector.shape_cast %77 : vector<4xf32> to vector<1x1x1x4xf32>
    %79 = vector.broadcast %78 : vector<1x1x1x4xf32> to vector<1x16x16x4xf32>
    %80 = arith.mulf %75, %79 : vector<1x16x16x4xf32>
    %81 = arith.addf %73, %80 : vector<1x16x16x4xf32>
    %82 = vector.shape_cast %81 : vector<1x16x16x4xf32> to vector<256x4xf32>
    %83 = arith.truncf %82 : vector<256x4xf32> to vector<256x4xbf16>
    %cst_19 = arith.constant dense<0.000000e+00> : vector<256x8xf32>
    %84 = tpu.matmul %83, %6, %cst_19 {dimension_numbers = #tpu.dot_dimension_numbers<[1], [0], [0], [1], [0, 0, 1, 1], [], []>} : vector<256x4xbf16>, vector<4x8xbf16>, vector<256x8xf32> -> vector<256x8xf32>
    %85 = vector.broadcast %7 : vector<1x8xf32> to vector<256x8xf32>
    %86 = arith.addf %84, %85 : vector<256x8xf32>
    %cst_20 = arith.constant 0.000000e+00 : f32
    %87 = vector.broadcast %cst_20 : f32 to vector<256x8xf32>
    %88 = arith.maximumf %86, %87 : vector<256x8xf32>
    %89 = vector.shape_cast %88 : vector<256x8xf32> to vector<1x16x16x8xf32>
    %cst_21 = arith.constant 0.000000e+00 : f32
    %90 = vector.broadcast %cst_21 : f32 to vector<1x16x1x8xf32>
    %91 = tpu.concatenate %90, %89, %90 in 2 : vector<1x16x1x8xf32>, vector<1x16x16x8xf32>, vector<1x16x1x8xf32> -> vector<1x16x18x8xf32>
    %c0_22 = arith.constant 0 : index
    %c1 = arith.constant 1 : index
    %c0_23 = arith.constant 0 : index
    %c0_24 = arith.constant 0 : index
    %92 = vector.load %arg5[%c0_22, %c1, %c0_23, %c0_24] : memref<1x18x18x8xf32, #tpu.memory_space<vmem>>, vector<1x16x18x8xf32>
    tpu.vector_store %arg5[%c0_22, %c1, %c0_23, %c0_24], %91 {strides = array<i32>} : memref<1x18x18x8xf32, #tpu.memory_space<vmem>>, vector<1x16x18x8xf32>,
    return
  }
  func.func @transform_0(%arg0: i32) -> (i32, i32, i32, i32) {
    %c0_i32 = arith.constant 0 : i32
    %c0_i32_0 = arith.constant 0 : i32
    %c0_i32_1 = arith.constant 0 : i32
    %c0_i32_2 = arith.constant 0 : i32
    return %arg0, %c0_i32, %c0_i32_0, %c0_i32_1 : i32, i32, i32, i32
  }
  func.func @transform_1(%arg0: i32) -> (i32, i32, i32) {
    %c0_i32 = arith.constant 0 : i32
    %c0_i32_0 = arith.constant 0 : i32
    %c0_i32_1 = arith.constant 0 : i32
    %c0_i32_2 = arith.constant 0 : i32
    return %c0_i32, %c0_i32_0, %c0_i32_1 : i32, i32, i32
  }
  func.func @transform_2(%arg0: i32) -> (i32, i32) {
    %c0_i32 = arith.constant 0 : i32
    %c0_i32_0 = arith.constant 0 : i32
    %c0_i32_1 = arith.constant 0 : i32
    return %c0_i32, %c0_i32_0 : i32, i32
  }
  func.func @transform_3(%arg0: i32) -> (i32, i32) {
    %c0_i32 = arith.constant 0 : i32
    %c0_i32_0 = arith.constant 0 : i32
    %c0_i32_1 = arith.constant 0 : i32
    return %c0_i32, %c0_i32_0 : i32, i32
  }
  func.func @transform_4(%arg0: i32) -> (i32, i32, i32, i32) {
    %c0_i32 = arith.constant 0 : i32
    %c0_i32_0 = arith.constant 0 : i32
    %c0_i32_1 = arith.constant 0 : i32
    %c0_i32_2 = arith.constant 0 : i32
    return %arg0, %c0_i32, %c0_i32_0, %c0_i32_1 : i32, i32, i32, i32
  }
}

</mosaic_0001>

<llo_original>
// kernel: tpu_custom_call.1
$region0: #{tpu_custom_call.1}
  #allocation0 [shape = 'u32[]', space=smem, size = 0x4, offset = 0x4, fixed_abs, tag = 'smem constant byte address 0x4 - core index']
  #allocation1 [shape = 'u32[144,128]{1,0:T(1,128)}', space=vmem, size = 0x12000, scoped, tag = 'internal scratch']
  %s0 = inlined_call_operand.vmem [shape: bf16[2,16,16,4], index: 0, kind: input, shape index: {}]
  %s1 = inlined_call_operand.vmem [shape: f32[3,3,4], index: 1, kind: input, shape index: {}]
  %s2 = inlined_call_operand.vmem [shape: bf16[4,8], index: 2, kind: input, shape index: {}]
  %s3 = inlined_call_operand.vmem [shape: f32[1,8], index: 3, kind: input, shape index: {}]
  %s4 = inlined_call_operand.vmem [shape: f32[2,18,18,8], index: 4, kind: output, shape index: {}]
  %s5 = sld [smem:[#allocation0]]
  $region49: #{tpu_custom_call.1} parent=0
    _
  %s7 = ssub.s32 1, %s5
  %s8 = scalar_select 0, %s7, %s5
  loop: start=0, step=1, limit=4
  $region2: #{tpu_custom_call.1} parent=0 // loop_pre_header
    _
  $region3: #{tpu_custom_call.1} parent=0 // loop_header
    %s10 = sphi 0, %s14
    %p11 = scmp.ge.s32.totalorder %s10, 4
    %s20 = sphi 0, %s22
    %s23 = sphi 0, %s20
    %s24 = sphi 0, %s23
    %s40 = sphi 0, %s24
    %s44 = sphi 0, %s44
    %s46 = sphi 0, %s44
    %s47 = sphi 0, %s46
    %s61 = sphi 0, %s47
    %s65 = sphi 0, %s65
    %s67 = sphi 0, %s65
    %s68 = sphi 0, %s67
    %s82 = sphi 0, %s68
    %s86 = sphi 0, %s86
    %s88 = sphi 0, %s86
    %s89 = sphi 0, %s88
    %s103 = sphi 0, %s89
    %s109 = sphi 0, %s111
    %s112 = sphi 0, %s109
    %s113 = sphi 0, %s112
    %s129 = sphi 0, %s113
  $region4: #{tpu_custom_call.1} parent=0 // loop_header_branch
    %13 = sbr.rel (%p11) target = $region8
  $region5: #{tpu_custom_call.1} parent=0 // loop_body
    %s15 = ssub.s32 %s10, 1
    %s16 = ssub.s32 %s10, 2
    %s17 = sadd.s32 %s10, 1
    %s18 = ssub.s32 %s10, %s17
    %p19 = scmp.eq.s32.totalorder %s18, 0
    %s21 = sadd.s32 %s20, 1
    %s22 = scalar_select %p19, %s20, %s21
    %p25 = pneg %p19
    %p26 = scmp.eq.s32.totalorder %s10, 1
    %p27 = por %p25, %p26
    %p28 = scmp.ne.s32.totalorder %s20, %s23
    %p29 = scmp.eq.s32.totalorder %s10, 0
    %p30 = por %p28, %p29
    %p31 = scmp.ne.s32.totalorder %s20, %s23
    %p32 = scmp.eq.s32.totalorder %s15, 1
    %p33 = por %p31, %p32
    %p34 = scmp.ne.s32.totalorder %s23, %s24
    %p35 = scmp.eq.s32.totalorder %s15, 0
    %p36 = por %p34, %p35
    %p37 = scmp.ne.s32.totalorder %s23, %s24
    %p38 = scmp.eq.s32.totalorder %s16, 1
    %p39 = por %p37, %p38
    %p41 = scmp.ne.s32.totalorder %s24, %s40
    %p42 = scmp.eq.s32.totalorder %s16, 0
    %p43 = por %p41, %p42
    %s45 = sadd.s32 %s44, 1
    %p48 = scmp.eq.s32.totalorder %s10, 1
    %p49 = scmp.ne.s32.totalorder %s44, %s46
    %p50 = scmp.eq.s32.totalorder %s10, 0
    %p51 = por %p49, %p50
    %p52 = scmp.ne.s32.totalorder %s44, %s46
    %p53 = scmp.eq.s32.totalorder %s15, 1
    %p54 = por %p52, %p53
    %p55 = scmp.ne.s32.totalorder %s46, %s47
    %p56 = scmp.eq.s32.totalorder %s15, 0
    %p57 = por %p55, %p56
    %p58 = scmp.ne.s32.totalorder %s46, %s47
    %p59 = scmp.eq.s32.totalorder %s16, 1
    %p60 = por %p58, %p59
    %p62 = scmp.ne.s32.totalorder %s47, %s61
    %p63 = scmp.eq.s32.totalorder %s16, 0
    %p64 = por %p62, %p63
    %s66 = sadd.s32 %s65, 1
    %p69 = scmp.eq.s32.totalorder %s10, 1
    %p70 = scmp.ne.s32.totalorder %s65, %s67
    %p71 = scmp.eq.s32.totalorder %s10, 0
    %p72 = por %p70, %p71
    %p73 = scmp.ne.s32.totalorder %s65, %s67
    %p74 = scmp.eq.s32.totalorder %s15, 1
    %p75 = por %p73, %p74
    %p76 = scmp.ne.s32.totalorder %s67, %s68
    %p77 = scmp.eq.s32.totalorder %s15, 0
    %p78 = por %p76, %p77
    %p79 = scmp.ne.s32.totalorder %s67, %s68
    %p80 = scmp.eq.s32.totalorder %s16, 1
    %p81 = por %p79, %p80
    %p83 = scmp.ne.s32.totalorder %s68, %s82
    %p84 = scmp.eq.s32.totalorder %s16, 0
    %p85 = por %p83, %p84
    %s87 = sadd.s32 %s86, 1
    %p90 = scmp.eq.s32.totalorder %s10, 1
    %p91 = scmp.ne.s32.totalorder %s86, %s88
    %p92 = scmp.eq.s32.totalorder %s10, 0
    %p93 = por %p91, %p92
    %p94 = scmp.ne.s32.totalorder %s86, %s88
    %p95 = scmp.eq.s32.totalorder %s15, 1
    %p96 = por %p94, %p95
    %p97 = scmp.ne.s32.totalorder %s88, %s89
    %p98 = scmp.eq.s32.totalorder %s15, 0
    %p99 = por %p97, %p98
    %p100 = scmp.ne.s32.totalorder %s88, %s89
    %p101 = scmp.eq.s32.totalorder %s16, 1
    %p102 = por %p100, %p101
    %p104 = scmp.ne.s32.totalorder %s89, %s103
    %p105 = scmp.eq.s32.totalorder %s16, 0
    %p106 = por %p104, %p105
    %s107 = ssub.s32 %s10, %s17
    %p108 = scmp.eq.s32.totalorder %s107, 0
    %s110 = sadd.s32 %s109, 1
    %s111 = scalar_select %p108, %s109, %s110
    %p114 = pneg %p108
    %p115 = scmp.eq.s32.totalorder %s10, 1
    %p116 = por %p114, %p115
    %p117 = scmp.ne.s32.totalorder %s109, %s112
    %p118 = scmp.eq.s32.totalorder %s10, 0
    %p119 = por %p117, %p118
    %p120 = scmp.ne.s32.totalorder %s109, %s112
    %p121 = scmp.eq.s32.totalorder %s15, 1
    %p122 = por %p120, %p121
    %p123 = scmp.ne.s32.totalorder %s112, %s113
    %p124 = scmp.eq.s32.totalorder %s15, 0
    %p125 = por %p123, %p124
    %p126 = scmp.ne.s32.totalorder %s112, %s113
    %p127 = scmp.eq.s32.totalorder %s16, 1
    %p128 = por %p126, %p127
    %p130 = scmp.ne.s32.totalorder %s113, %s129
    %p131 = scmp.eq.s32.totalorder %s16, 0
    %p132 = por %p130, %p131
    %p133 = scmp.le.s32.totalorder 1, %s10
    %p134 = scmp.lt.s32.totalorder %s10, 3
    %p135 = pnand %p133, %p134
    %p136 = pneg %p135
    // Predicated region
    $region9: #{tpu_custom_call.1} parent=5 // pred_check
      _
    $region10: #{tpu_custom_call.1} parent=5 // pred_check_branch
      %138 = sbr.rel (%p135) target = $region12
    $region11: #{tpu_custom_call.1} parent=5 // pred_region
      %s139 = ssub.s32 %s10, 1
      // Predicated region
      $region13: #{tpu_custom_call.1} parent=11 // pred_check
        %p140 = pneg %p57
      $region14: #{tpu_custom_call.1} parent=11 // pred_check_branch
        %142 = sbr.rel (%p140) target = $region16
      $region15: #{tpu_custom_call.1} parent=11 // pred_region
        _
      $region16: #{tpu_custom_call.1} parent=11 // pred_fallthru
        _
      // Predicated region
      $region17: #{tpu_custom_call.1} parent=11 // pred_check
        %p143 = pneg %p78
      $region18: #{tpu_custom_call.1} parent=11 // pred_check_branch
        %145 = sbr.rel (%p143) target = $region20
      $region19: #{tpu_custom_call.1} parent=11 // pred_region
        _
      $region20: #{tpu_custom_call.1} parent=11 // pred_fallthru
        _
      // Predicated region
      $region21: #{tpu_custom_call.1} parent=11 // pred_check
        %p146 = pneg %p99
      $region22: #{tpu_custom_call.1} parent=11 // pred_check_branch
        %148 = sbr.rel (%p146) target = $region24
      $region23: #{tpu_custom_call.1} parent=11 // pred_region
        _
      $region24: #{tpu_custom_call.1} parent=11 // pred_fallthru
        _
    $region12: #{tpu_custom_call.1} parent=5 // pred_fallthru
      _
    %p149 = scmp.lt.s32.totalorder %s10, 2
    // Predicated region
    $region25: #{tpu_custom_call.1} parent=5 // pred_check
      %p150 = pneg %p149
    $region26: #{tpu_custom_call.1} parent=5 // pred_check_branch
      %152 = sbr.rel (%p150) target = $region28
    $region27: #{tpu_custom_call.1} parent=5 // pred_region
      // Predicated region
      $region29: #{tpu_custom_call.1} parent=27 // pred_check
        %p153 = pneg %p30
      $region30: #{tpu_custom_call.1} parent=27 // pred_check_branch
        %155 = sbr.rel (%p153) target = $region32
      $region31: #{tpu_custom_call.1} parent=27 // pred_region
        %p156 = scmp.lt.s32.totalorder %s10, 1
        %s157 = scalar_select %p156, %s10, 1
        %s158 = smul.addr %s157, 32
        %s159 = smul.addr %s158, 4
        %s160 = scalar_lea.vmem %s0, %s159
      $region32: #{tpu_custom_call.1} parent=27 // pred_fallthru
        _
    $region28: #{tpu_custom_call.1} parent=5 // pred_fallthru
      _
    %p161 = scmp.le.s32.totalorder 1, %s10
    %p162 = scmp.lt.s32.totalorder %s10, 3
    %p163 = pnand %p161, %p162
    %p164 = pneg %p163
    // Predicated region
    $region33: #{tpu_custom_call.1} parent=5 // pred_check
      _
    $region34: #{tpu_custom_call.1} parent=5 // pred_check_branch
      %166 = sbr.rel (%p163) target = $region36
    $region35: #{tpu_custom_call.1} parent=5 // pred_region
      %s167 = ssub.s32 %s10, 1
      %p168 = scmp.lt.s32.totalorder %s15, 1
      %s169 = scalar_select %p168, %s15, 1
      %s170 = smul.addr %s169, 32
      %s171 = smul.addr %s170, 4
      %s172 = scalar_lea.vmem %s0, %s171
      %p173 = pneg %p36
      %p174 = pneg %p33
      %p175 = pneg %p57
      %p176 = pneg %p54
      %p177 = pneg %p78
      %p178 = pneg %p75
      %p179 = pneg %p99
      %p180 = pneg %p96
      %p181 = pneg %p125
      %p182 = pneg %p122
      %p183 = scmp.lt.s32.totalorder %s15, 1
      %s184 = scalar_select %p183, %s15, 1
      %s185 = smul.addr %s184, 54
      %s186 = smul.addr %s185, 8
      %s187 = scalar_lea.vmem %s4, %s186
      %p188 = scmp.lt.s32.totalorder %s15, 1
      %s189 = scalar_select %p188, %s15, 1
      %s190 = smul.addr %s189, 32
      %s191 = smul.addr %s190, 4
      %s192 = scalar_lea.vmem %s0, %s191
      %p193 = scmp.lt.s32.totalorder %s15, 1
      %s194 = scalar_select %p193, %s15, 1
      %s195 = smul.addr %s194, 54
      %s196 = smul.addr %s195, 8
      %s197 = scalar_lea.vmem %s4, %s196
      %v199 = vld [vmem:[%s192] sm:$0xf]
      %v200 = vld [vmem:[%s192 + $0x4] sm:$0xf]
      %v201 = vld [vmem:[%s192 + $0x8] sm:$0xf]
      %v202 = vld [vmem:[%s192 + $0xc] sm:$0xf]
      %v203 = vld [vmem:[%s192 + $0x10] sm:$0xf]
      %v204 = vld [vmem:[%s192 + $0x14] sm:$0xf]
      %v205 = vld [vmem:[%s192 + $0x18] sm:$0xf]
      %v206 = vld [vmem:[%s192 + $0x1c] sm:$0xf]
      %v207 = vld [vmem:[%s192 + $0x20] sm:$0xf]
      %v208 = vld [vmem:[%s192 + $0x24] sm:$0xf]
      %v209 = vld [vmem:[%s192 + $0x28] sm:$0xf]
      %v210 = vld [vmem:[%s192 + $0x2c] sm:$0xf]
      %v211 = vld [vmem:[%s192 + $0x30] sm:$0xf]
      %v212 = vld [vmem:[%s192 + $0x34] sm:$0xf]
      %v213 = vld [vmem:[%s192 + $0x38] sm:$0xf]
      %v214 = vld [vmem:[%s192 + $0x3c] sm:$0xf]
      %v215 = vld [vmem:[%s192 + $0x40] sm:$0xf]
      %v216 = vld [vmem:[%s192 + $0x44] sm:$0xf]
      %v217 = vld [vmem:[%s192 + $0x48] sm:$0xf]
      %v218 = vld [vmem:[%s192 + $0x4c] sm:$0xf]
      %v219 = vld [vmem:[%s192 + $0x50] sm:$0xf]
      %v220 = vld [vmem:[%s192 + $0x54] sm:$0xf]
      %v221 = vld [vmem:[%s192 + $0x58] sm:$0xf]
      %v222 = vld [vmem:[%s192 + $0x5c] sm:$0xf]
      %v223 = vld [vmem:[%s192 + $0x60] sm:$0xf]
      %v224 = vld [vmem:[%s192 + $0x64] sm:$0xf]
      %v225 = vld [vmem:[%s192 + $0x68] sm:$0xf]
      %v226 = vld [vmem:[%s192 + $0x6c] sm:$0xf]
      %v227 = vld [vmem:[%s192 + $0x70] sm:$0xf]
      %v228 = vld [vmem:[%s192 + $0x74] sm:$0xf]
      %v229 = vld [vmem:[%s192 + $0x78] sm:$0xf]
      %v230 = vld [vmem:[%s192 + $0x7c] sm:$0xf]
      %v263 = vunpack.c.l.b16 %v199
      %v264 = vunpack.c.l.b16 %v200
      %v265 = vunpack.c.l.b16 %v201
      %v266 = vunpack.c.l.b16 %v202
      %v267 = vunpack.c.l.b16 %v203
      %v268 = vunpack.c.l.b16 %v204
      %v269 = vunpack.c.l.b16 %v205
      %v270 = vunpack.c.l.b16 %v206
      %v271 = vunpack.c.l.b16 %v207
      %v272 = vunpack.c.l.b16 %v208
      %v273 = vunpack.c.l.b16 %v209
      %v274 = vunpack.c.l.b16 %v210
      %v275 = vunpack.c.l.b16 %v211
      %v276 = vunpack.c.l.b16 %v212
      %v277 = vunpack.c.l.b16 %v213
      %v278 = vunpack.c.l.b16 %v214
      %v279 = vunpack.c.l.b16 %v215
      %v280 = vunpack.c.l.b16 %v216
      %v281 = vunpack.c.l.b16 %v217
      %v282 = vunpack.c.l.b16 %v218
      %v283 = vunpack.c.l.b16 %v219
      %v284 = vunpack.c.l.b16 %v220
      %v285 = vunpack.c.l.b16 %v221
      %v286 = vunpack.c.l.b16 %v222
      %v287 = vunpack.c.l.b16 %v223
      %v288 = vunpack.c.l.b16 %v224
      %v289 = vunpack.c.l.b16 %v225
      %v290 = vunpack.c.l.b16 %v226
      %v291 = vunpack.c.l.b16 %v227
      %v292 = vunpack.c.l.b16 %v228
      %v293 = vunpack.c.l.b16 %v229
      %v294 = vunpack.c.l.b16 %v230
      %v295 = vpack.c.b16 %v264, %v263
      %v296 = vpack.c.b16 %v266, %v265
      %v297 = vpack.c.b16 %v268, %v267
      %v298 = vpack.c.b16 %v270, %v269
      %v299 = vpack.c.b16 %v272, %v271
      %v300 = vpack.c.b16 %v274, %v273
      %v301 = vpack.c.b16 %v276, %v275
      %v302 = vpack.c.b16 %v278, %v277
      %v303 = vpack.c.b16 %v280, %v279
      %v304 = vpack.c.b16 %v282, %v281
      %v305 = vpack.c.b16 %v284, %v283
      %v306 = vpack.c.b16 %v286, %v285
      %v307 = vpack.c.b16 %v288, %v287
      %v308 = vpack.c.b16 %v290, %v289
      %v309 = vpack.c.b16 %v292, %v291
      %v310 = vpack.c.b16 %v294, %v293
      %v312 = vshrl.u32 %v295, 16
      %v314 = vrot.slane %v312, 7
      %v315 = vshll.u32 %v295, 16
      %v317 = vor.u32 %v314, %v315
      %v319 = vshrl.u32 %v296, 16
      %v321 = vrot.slane %v319, 7
      %v322 = vshll.u32 %v296, 16
      %v324 = vor.u32 %v321, %v322
      %v326 = vshrl.u32 %v297, 16
      %v328 = vrot.slane %v326, 7
      %v329 = vshll.u32 %v297, 16
      %v331 = vor.u32 %v328, %v329
      %v333 = vshrl.u32 %v298, 16
      %v335 = vrot.slane %v333, 7
      %v336 = vshll.u32 %v298, 16
      %v338 = vor.u32 %v335, %v336
      %v340 = vshrl.u32 %v299, 16
      %v342 = vrot.slane %v340, 7
      %v343 = vshll.u32 %v299, 16
      %v345 = vor.u32 %v342, %v343
      %v347 = vshrl.u32 %v300, 16
      %v349 = vrot.slane %v347, 7
      %v350 = vshll.u32 %v300, 16
      %v352 = vor.u32 %v349, %v350
      %v354 = vshrl.u32 %v301, 16
      %v356 = vrot.slane %v354, 7
      %v357 = vshll.u32 %v301, 16
      %v359 = vor.u32 %v356, %v357
      %v361 = vshrl.u32 %v302, 16
      %v363 = vrot.slane %v361, 7
      %v364 = vshll.u32 %v302, 16
      %v366 = vor.u32 %v363, %v364
      %v368 = vshrl.u32 %v303, 16
      %v370 = vrot.slane %v368, 7
      %v371 = vshll.u32 %v303, 16
      %v373 = vor.u32 %v370, %v371
      %v375 = vshrl.u32 %v304, 16
      %v377 = vrot.slane %v375, 7
      %v378 = vshll.u32 %v304, 16
      %v380 = vor.u32 %v377, %v378
      %v382 = vshrl.u32 %v305, 16
      %v384 = vrot.slane %v382, 7
      %v385 = vshll.u32 %v305, 16
      %v387 = vor.u32 %v384, %v385
      %v389 = vshrl.u32 %v306, 16
      %v391 = vrot.slane %v389, 7
      %v392 = vshll.u32 %v306, 16
      %v394 = vor.u32 %v391, %v392
      %v396 = vshrl.u32 %v307, 16
      %v398 = vrot.slane %v396, 7
      %v399 = vshll.u32 %v307, 16
      %v401 = vor.u32 %v398, %v399
      %v403 = vshrl.u32 %v308, 16
      %v405 = vrot.slane %v403, 7
      %v406 = vshll.u32 %v308, 16
      %v408 = vor.u32 %v405, %v406
      %v410 = vshrl.u32 %v309, 16
      %v412 = vrot.slane %v410, 7
      %v413 = vshll.u32 %v309, 16
      %v415 = vor.u32 %v412, %v413
      %v417 = vshrl.u32 %v310, 16
      %v419 = vrot.slane %v417, 7
      %v420 = vshll.u32 %v310, 16
      %v422 = vor.u32 %v419, %v420
      %vm455 = vcmask 1040384
      %vm456 = vsmask.f32 256
      %vm457 = vmand %vm455, %vm456
      %v458 = vsel %vm457, 0, %v317
      %v459 = vsel %vm457, 0, %v324
      %v460 = vsel %vm457, 0, %v331
      %v461 = vsel %vm457, 0, %v338
      %v462 = vsel %vm457, 0, %v345
      %v463 = vsel %vm457, 0, %v352
      %v464 = vsel %vm457, 0, %v359
      %v465 = vsel %vm457, 0, %v366
      %v466 = vsel %vm457, 0, %v373
      %v467 = vsel %vm457, 0, %v380
      %v468 = vsel %vm457, 0, %v387
      %v469 = vsel %vm457, 0, %v394
      %v470 = vsel %vm457, 0, %v401
      %v471 = vsel %vm457, 0, %v408
      %v472 = vsel %vm457, 0, %v415
      %v473 = vsel %vm457, 0, %v422
      %v474 = vsel %vm457, %v314, 0
      %v475 = vsel %vm457, %v321, 0
      %v476 = vsel %vm457, %v328, 0
      %v477 = vsel %vm457, %v335, 0
      %v478 = vsel %vm457, %v342, 0
      %v479 = vsel %vm457, %v349, 0
      %v480 = vsel %vm457, %v356, 0
      %v481 = vsel %vm457, %v363, 0
      %v482 = vsel %vm457, %v370, 0
      %v483 = vsel %vm457, %v377, 0
      %v484 = vsel %vm457, %v384, 0
      %v485 = vsel %vm457, %v391, 0
      %v486 = vsel %vm457, %v398, 0
      %v487 = vsel %vm457, %v405, 0
      %v488 = vsel %vm457, %v412, 0
      %v489 = vsel %vm457, %v419, 0
      %v490 = vld [vmem:[%s1] sm:$0x7]
      %v491 = vld [vmem:[%s1 + $0x4] sm:$0x7]
      %v492 = vld [vmem:[%s1 + $0x8] sm:$0x7]
      %v493 = vld [vmem:[%s2] sm:$0x3]
      %v494 = vld [vmem:[%s3] sm:$0x1]
      %vm495 = vcmask 64512
      %496 = vst.msk [vmem:[%s197] sm:$0xff] %vm495, 0.0
      %497 = vst.msk [vmem:[%s197 + $0x8] sm:$0xff] %vm495, 0.0
      %vm498 = vcmask 58368
      %499 = vst.msk [vmem:[%s197 + $0x10] sm:$0x3] %vm498, 0.0
      %s500 = scalar_lea.vmem %s197, 408
      %501 = vst.msk [vmem:[%s500] sm:$0xff] %vm495, 0.0
      %502 = vst.msk [vmem:[%s500 + $0x8] sm:$0xff] %vm495, 0.0
      %503 = vst.msk [vmem:[%s500 + $0x10] sm:$0x3] %vm498, 0.0
      %v504 = vunpack.c.l.bf16 0
      %v505 = vunpack.c.h.bf16 0
      %v506 = vunpack.c.l.bf16 %v458
      %v507 = vunpack.c.h.bf16 %v458
      %v508 = vunpack.c.l.bf16 %v459
      %v509 = vunpack.c.h.bf16 %v459
      %v510 = vunpack.c.l.bf16 %v460
      %v511 = vunpack.c.h.bf16 %v460
      %v512 = vunpack.c.l.bf16 %v461
      %v513 = vunpack.c.h.bf16 %v461
      %v514 = vunpack.c.l.bf16 %v462
      %v515 = vunpack.c.h.bf16 %v462
      %v516 = vunpack.c.l.bf16 %v463
      %v517 = vunpack.c.h.bf16 %v463
      %v518 = vunpack.c.l.bf16 %v464
      %v519 = vunpack.c.h.bf16 %v464
      %v520 = vunpack.c.l.bf16 %v465
      %v521 = vunpack.c.h.bf16 %v465
      %v522 = vunpack.c.l.bf16 %v466
      %v523 = vunpack.c.h.bf16 %v466
      %v524 = vunpack.c.l.bf16 %v467
      %v525 = vunpack.c.h.bf16 %v467
      %v526 = vunpack.c.l.bf16 %v468
      %v527 = vunpack.c.h.bf16 %v468
      %v528 = vunpack.c.l.bf16 %v469
      %v529 = vunpack.c.h.bf16 %v469
      %v530 = vunpack.c.l.bf16 %v470
      %v531 = vunpack.c.h.bf16 %v470
      %v532 = vunpack.c.l.bf16 %v471
      %v533 = vunpack.c.h.bf16 %v471
      %v534 = vunpack.c.l.bf16 %v472
      %v535 = vunpack.c.h.bf16 %v472
      %v536 = vlaneseq
      %v537 = vshrl.u32 %v536, 7
      %v538 = vsub.s32 0, %v537
      %v539 = vrot.slane %v490, %v538
      %v540 = vmul.f32 %v504, %v539
      %v541 = vmul.f32 %v505, %v539
      %v542 = vmul.f32 %v506, %v539
      %v543 = vmul.f32 %v507, %v539
      %v544 = vmul.f32 %v508, %v539
      %v545 = vmul.f32 %v509, %v539
      %v546 = vmul.f32 %v510, %v539
      %v547 = vmul.f32 %v511, %v539
      %v548 = vmul.f32 %v512, %v539
      %v549 = vmul.f32 %v513, %v539
      %v550 = vmul.f32 %v514, %v539
      %v551 = vmul.f32 %v515, %v539
      %v552 = vmul.f32 %v516, %v539
      %v553 = vmul.f32 %v517, %v539
      %v554 = vmul.f32 %v518, %v539
      %v555 = vmul.f32 %v519, %v539
      %v556 = vmul.f32 %v520, %v539
      %v557 = vmul.f32 %v521, %v539
      %v558 = vmul.f32 %v522, %v539
      %v559 = vmul.f32 %v523, %v539
      %v560 = vmul.f32 %v524, %v539
      %v561 = vmul.f32 %v525, %v539
      %v562 = vmul.f32 %v526, %v539
      %v563 = vmul.f32 %v527, %v539
      %v564 = vmul.f32 %v528, %v539
      %v565 = vmul.f32 %v529, %v539
      %v566 = vmul.f32 %v530, %v539
      %v567 = vmul.f32 %v531, %v539
      %v568 = vmul.f32 %v532, %v539
      %v569 = vmul.f32 %v533, %v539
      %v570 = vmul.f32 %v534, %v539
      %v571 = vmul.f32 %v535, %v539
      %v572 = vunpack.c.l.bf16 %v474
      %v573 = vunpack.c.l.bf16 %v475
      %v574 = vunpack.c.l.bf16 %v476
      %v575 = vunpack.c.l.bf16 %v477
      %v576 = vunpack.c.l.bf16 %v478
      %v577 = vunpack.c.l.bf16 %v479
      %v578 = vunpack.c.l.bf16 %v480
      %v579 = vunpack.c.l.bf16 %v481
      %v580 = vunpack.c.l.bf16 %v482
      %v581 = vunpack.c.l.bf16 %v483
      %v582 = vunpack.c.l.bf16 %v484
      %v583 = vunpack.c.l.bf16 %v485
      %v584 = vunpack.c.l.bf16 %v486
      %v585 = vunpack.c.l.bf16 %v487
      %v586 = vunpack.c.l.bf16 %v488
      %v587 = vlaneseq
      %v588 = vshrl.u32 %v587, 7
      %v589 = vsub.s32 1, %v588
      %v590 = vrot.slane %v490, %v589
      %v591 = vmul.f32 %v504, %v590
      %v592 = vmul.f32 %v505, %v590
      %v593 = vmul.f32 %v506, %v590
      %v594 = vmul.f32 %v507, %v590
      %v595 = vmul.f32 %v572, %v590
      %v596 = vmul.f32 %v508, %v590
      %v597 = vmul.f32 %v509, %v590
      %v598 = vmul.f32 %v573, %v590
      %v599 = vmul.f32 %v510, %v590
      %v600 = vmul.f32 %v511, %v590
      %v601 = vmul.f32 %v574, %v590
      %v602 = vmul.f32 %v512, %v590
      %v603 = vmul.f32 %v513, %v590
      %v604 = vmul.f32 %v575, %v590
      %v605 = vmul.f32 %v514, %v590
      %v606 = vmul.f32 %v515, %v590
      %v607 = vmul.f32 %v576, %v590
      %v608 = vmul.f32 %v516, %v590
      %v609 = vmul.f32 %v517, %v590
      %v610 = vmul.f32 %v577, %v590
      %v611 = vmul.f32 %v518, %v590
      %v612 = vmul.f32 %v519, %v590
      %v613 = vmul.f32 %v578, %v590
      %v614 = vmul.f32 %v520, %v590
      %v615 = vmul.f32 %v521, %v590
      %v616 = vmul.f32 %v579, %v590
      %v617 = vmul.f32 %v522, %v590
      %v618 = vmul.f32 %v523, %v590
      %v619 = vmul.f32 %v580, %v590
      %v620 = vmul.f32 %v524, %v590
      %v621 = vmul.f32 %v525, %v590
      %v622 = vmul.f32 %v581, %v590
      %v623 = vmul.f32 %v526, %v590
      %v624 = vmul.f32 %v527, %v590
      %v625 = vmul.f32 %v582, %v590
      %v626 = vmul.f32 %v528, %v590
      %v627 = vmul.f32 %v529, %v590
      %v628 = vmul.f32 %v583, %v590
      %v629 = vmul.f32 %v530, %v590
      %v630 = vmul.f32 %v531, %v590
      %v631 = vmul.f32 %v584, %v590
      %v632 = vmul.f32 %v532, %v590
      %v633 = vmul.f32 %v533, %v590
      %v634 = vmul.f32 %v585, %v590
      %v635 = vmul.f32 %v534, %v590
      %v636 = vmul.f32 %v535, %v590
      %v637 = vmul.f32 %v586, %v590
      %vm685 = vcmask 1046528
      %v686 = vrot.slane %v591, 1
      %v687 = vrot.slane %v592, 1
      %v688 = vsel %vm685, %v686, %v687
      %v689 = vsel %vm685, %v687, %v686
      %v690 = vrot.slane %v593, 1
      %v691 = vrot.slane %v594, 1
      %v692 = vsel %vm685, %v690, %v691
      %v693 = vrot.slane %v595, 1
      %v694 = vsel %vm685, %v691, %v693
      %v695 = vrot.slane %v596, 1
      %v696 = vrot.slane %v597, 1
      %v697 = vsel %vm685, %v695, %v696
      %v698 = vrot.slane %v598, 1
      %v699 = vsel %vm685, %v696, %v698
      %v700 = vrot.slane %v599, 1
      %v701 = vrot.slane %v600, 1
      %v702 = vsel %vm685, %v700, %v701
      %v703 = vrot.slane %v601, 1
      %v704 = vsel %vm685, %v701, %v703
      %v705 = vrot.slane %v602, 1
      %v706 = vrot.slane %v603, 1
      %v707 = vsel %vm685, %v705, %v706
      %v708 = vrot.slane %v604, 1
      %v709 = vsel %vm685, %v706, %v708
      %v710 = vrot.slane %v605, 1
      %v711 = vrot.slane %v606, 1
      %v712 = vsel %vm685, %v710, %v711
      %v713 = vrot.slane %v607, 1
      %v714 = vsel %vm685, %v711, %v713
      %v715 = vrot.slane %v608, 1
      %v716 = vrot.slane %v609, 1
      %v717 = vsel %vm685, %v715, %v716
      %v718 = vrot.slane %v610, 1
      %v719 = vsel %vm685, %v716, %v718
      %v720 = vrot.slane %v611, 1
      %v721 = vrot.slane %v612, 1
      %v722 = vsel %vm685, %v720, %v721
      %v723 = vrot.slane %v613, 1
      %v724 = vsel %vm685, %v721, %v723
      %v725 = vrot.slane %v614, 1
      %v726 = vrot.slane %v615, 1
      %v727 = vsel %vm685, %v725, %v726
      %v728 = vrot.slane %v616, 1
      %v729 = vsel %vm685, %v726, %v728
      %v730 = vrot.slane %v617, 1
      %v731 = vrot.slane %v618, 1
      %v732 = vsel %vm685, %v730, %v731
      %v733 = vrot.slane %v619, 1
      %v734 = vsel %vm685, %v731, %v733
      %v735 = vrot.slane %v620, 1
      %v736 = vrot.slane %v621, 1
      %v737 = vsel %vm685, %v735, %v736
      %v738 = vrot.slane %v622, 1
      %v739 = vsel %vm685, %v736, %v738
      %v740 = vrot.slane %v623, 1
      %v741 = vrot.slane %v624, 1
      %v742 = vsel %vm685, %v740, %v741
      %v743 = vrot.slane %v625, 1
      %v744 = vsel %vm685, %v741, %v743
      %v745 = vrot.slane %v626, 1
      %v746 = vrot.slane %v627, 1
      %v747 = vsel %vm685, %v745, %v746
      %v748 = vrot.slane %v628, 1
      %v749 = vsel %vm685, %v746, %v748
      %v750 = vrot.slane %v629, 1
      %v751 = vrot.slane %v630, 1
      %v752 = vsel %vm685, %v750, %v751
      %v753 = vrot.slane %v631, 1
      %v754 = vsel %vm685, %v751, %v753
      %v755 = vrot.slane %v632, 1
      %v756 = vrot.slane %v633, 1
      %v757 = vsel %vm685, %v755, %v756
      %v758 = vrot.slane %v634, 1
      %v759 = vsel %vm685, %v756, %v758
      %v760 = vrot.slane %v635, 1
      %v761 = vrot.slane %v636, 1
      %v762 = vsel %vm685, %v760, %v761
      %v763 = vrot.slane %v637, 1
      %v764 = vsel %vm685, %v761, %v763
      %v797 = vadd.f32 %v540, %v688
      %v798 = vadd.f32 %v541, %v689
      %v799 = vadd.f32 %v542, %v692
      %v800 = vadd.f32 %v543, %v694
      %v801 = vadd.f32 %v544, %v697
      %v802 = vadd.f32 %v545, %v699
      %v803 = vadd.f32 %v546, %v702
      %v804 = vadd.f32 %v547, %v704
      %v805 = vadd.f32 %v548, %v707
      %v806 = vadd.f32 %v549, %v709
      %v807 = vadd.f32 %v550, %v712
      %v808 = vadd.f32 %v551, %v714
      %v809 = vadd.f32 %v552, %v717
      %v810 = vadd.f32 %v553, %v719
      %v811 = vadd.f32 %v554, %v722
      %v812 = vadd.f32 %v555, %v724
      %v813 = vadd.f32 %v556, %v727
      %v814 = vadd.f32 %v557, %v729
      %v815 = vadd.f32 %v558, %v732
      %v816 = vadd.f32 %v559, %v734
      %v817 = vadd.f32 %v560, %v737
      %v818 = vadd.f32 %v561, %v739
      %v819 = vadd.f32 %v562, %v742
      %v820 = vadd.f32 %v563, %v744
      %v821 = vadd.f32 %v564, %v747
      %v822 = vadd.f32 %v565, %v749
      %v823 = vadd.f32 %v566, %v752
      %v824 = vadd.f32 %v567, %v754
      %v825 = vadd.f32 %v568, %v757
      %v826 = vadd.f32 %v569, %v759
      %v827 = vadd.f32 %v570, %v762
      %v828 = vadd.f32 %v571, %v764
      %v829 = vlaneseq
      %v830 = vshrl.u32 %v829, 7
      %v831 = vsub.s32 2, %v830
      %v832 = vrot.slane %v490, %v831
      %v833 = vmul.f32 %v504, %v832
      %v834 = vmul.f32 %v505, %v832
      %v835 = vmul.f32 %v506, %v832
      %v836 = vmul.f32 %v507, %v832
      %v837 = vmul.f32 %v572, %v832
      %v838 = vmul.f32 %v508, %v832
      %v839 = vmul.f32 %v509, %v832
      %v840 = vmul.f32 %v573, %v832
      %v841 = vmul.f32 %v510, %v832
      %v842 = vmul.f32 %v511, %v832
      %v843 = vmul.f32 %v574, %v832
      %v844 = vmul.f32 %v512, %v832
      %v845 = vmul.f32 %v513, %v832
      %v846 = vmul.f32 %v575, %v832
      %v847 = vmul.f32 %v514, %v832
      %v848 = vmul.f32 %v515, %v832
      %v849 = vmul.f32 %v576, %v832
      %v850 = vmul.f32 %v516, %v832
      %v851 = vmul.f32 %v517, %v832
      %v852 = vmul.f32 %v577, %v832
      %v853 = vmul.f32 %v518, %v832
      %v854 = vmul.f32 %v519, %v832
      %v855 = vmul.f32 %v578, %v832
      %v856 = vmul.f32 %v520, %v832
      %v857 = vmul.f32 %v521, %v832
      %v858 = vmul.f32 %v579, %v832
      %v859 = vmul.f32 %v522, %v832
      %v860 = vmul.f32 %v523, %v832
      %v861 = vmul.f32 %v580, %v832
      %v862 = vmul.f32 %v524, %v832
      %v863 = vmul.f32 %v525, %v832
      %v864 = vmul.f32 %v581, %v832
      %v865 = vmul.f32 %v526, %v832
      %v866 = vmul.f32 %v527, %v832
      %v867 = vmul.f32 %v582, %v832
      %v868 = vmul.f32 %v528, %v832
      %v869 = vmul.f32 %v529, %v832
      %v870 = vmul.f32 %v583, %v832
      %v871 = vmul.f32 %v530, %v832
      %v872 = vmul.f32 %v531, %v832
      %v873 = vmul.f32 %v584, %v832
      %v874 = vmul.f32 %v532, %v832
      %v875 = vmul.f32 %v533, %v832
      %v876 = vmul.f32 %v585, %v832
      %v877 = vmul.f32 %v534, %v832
      %v878 = vmul.f32 %v535, %v832
      %v879 = vmul.f32 %v586, %v832
      %vm927 = vcmask 1045504
      %v928 = vrot.slane %v833, 2
      %v929 = vrot.slane %v834, 2
      %v930 = vsel %vm927, %v928, %v929
      %v931 = vsel %vm927, %v929, %v928
      %v932 = vrot.slane %v835, 2
      %v933 = vrot.slane %v836, 2
      %v934 = vsel %vm927, %v932, %v933
      %v935 = vrot.slane %v837, 2
      %v936 = vsel %vm927, %v933, %v935
      %v937 = vrot.slane %v838, 2
      %v938 = vrot.slane %v839, 2
      %v939 = vsel %vm927, %v937, %v938
      %v940 = vrot.slane %v840, 2
      %v941 = vsel %vm927, %v938, %v940
      %v942 = vrot.slane %v841, 2
      %v943 = vrot.slane %v842, 2
      %v944 = vsel %vm927, %v942, %v943
      %v945 = vrot.slane %v843, 2
      %v946 = vsel %vm927, %v943, %v945
      %v947 = vrot.slane %v844, 2
      %v948 = vrot.slane %v845, 2
      %v949 = vsel %vm927, %v947, %v948
      %v950 = vrot.slane %v846, 2
      %v951 = vsel %vm927, %v948, %v950
      %v952 = vrot.slane %v847, 2
      %v953 = vrot.slane %v848, 2
      %v954 = vsel %vm927, %v952, %v953
      %v955 = vrot.slane %v849, 2
      %v956 = vsel %vm927, %v953, %v955
      %v957 = vrot.slane %v850, 2
      %v958 = vrot.slane %v851, 2
      %v959 = vsel %vm927, %v957, %v958
      %v960 = vrot.slane %v852, 2
      %v961 = vsel %vm927, %v958, %v960
      %v962 = vrot.slane %v853, 2
      %v963 = vrot.slane %v854, 2
      %v964 = vsel %vm927, %v962, %v963
      %v965 = vrot.slane %v855, 2
      %v966 = vsel %vm927, %v963, %v965
      %v967 = vrot.slane %v856, 2
      %v968 = vrot.slane %v857, 2
      %v969 = vsel %vm927, %v967, %v968
      %v970 = vrot.slane %v858, 2
      %v971 = vsel %vm927, %v968, %v970
      %v972 = vrot.slane %v859, 2
      %v973 = vrot.slane %v860, 2
      %v974 = vsel %vm927, %v972, %v973
      %v975 = vrot.slane %v861, 2
      %v976 = vsel %vm927, %v973, %v975
      %v977 = vrot.slane %v862, 2
      %v978 = vrot.slane %v863, 2
      %v979 = vsel %vm927, %v977, %v978
      %v980 = vrot.slane %v864, 2
      %v981 = vsel %vm927, %v978, %v980
      %v982 = vrot.slane %v865, 2
      %v983 = vrot.slane %v866, 2
      %v984 = vsel %vm927, %v982, %v983
      %v985 = vrot.slane %v867, 2
      %v986 = vsel %vm927, %v983, %v985
      %v987 = vrot.slane %v868, 2
      %v988 = vrot.slane %v869, 2
      %v989 = vsel %vm927, %v987, %v988
      %v990 = vrot.slane %v870, 2
      %v991 = vsel %vm927, %v988, %v990
      %v992 = vrot.slane %v871, 2
      %v993 = vrot.slane %v872, 2
      %v994 = vsel %vm927, %v992, %v993
      %v995 = vrot.slane %v873, 2
      %v996 = vsel %vm927, %v993, %v995
      %v997 = vrot.slane %v874, 2
      %v998 = vrot.slane %v875, 2
      %v999 = vsel %vm927, %v997, %v998
      %v1000 = vrot.slane %v876, 2
      %v1001 = vsel %vm927, %v998, %v1000
      %v1002 = vrot.slane %v877, 2
      %v1003 = vrot.slane %v878, 2
      %v1004 = vsel %vm927, %v1002, %v1003
      %v1005 = vrot.slane %v879, 2
      %v1006 = vsel %vm927, %v1003, %v1005
      %v1039 = vadd.f32 %v797, %v930
      %v1040 = vadd.f32 %v798, %v931
      %v1041 = vadd.f32 %v799, %v934
      %v1042 = vadd.f32 %v800, %v936
      %v1043 = vadd.f32 %v801, %v939
      %v1044 = vadd.f32 %v802, %v941
      %v1045 = vadd.f32 %v803, %v944
      %v1046 = vadd.f32 %v804, %v946
      %v1047 = vadd.f32 %v805, %v949
      %v1048 = vadd.f32 %v806, %v951
      %v1049 = vadd.f32 %v807, %v954
      %v1050 = vadd.f32 %v808, %v956
      %v1051 = vadd.f32 %v809, %v959
      %v1052 = vadd.f32 %v810, %v961
      %v1053 = vadd.f32 %v811, %v964
      %v1054 = vadd.f32 %v812, %v966
      %v1055 = vadd.f32 %v813, %v969
      %v1056 = vadd.f32 %v814, %v971
      %v1057 = vadd.f32 %v815, %v974
      %v1058 = vadd.f32 %v816, %v976
      %v1059 = vadd.f32 %v817, %v979
      %v1060 = vadd.f32 %v818, %v981
      %v1061 = vadd.f32 %v819, %v984
      %v1062 = vadd.f32 %v820, %v986
      %v1063 = vadd.f32 %v821, %v989
      %v1064 = vadd.f32 %v822, %v991
      %v1065 = vadd.f32 %v823, %v994
      %v1066 = vadd.f32 %v824, %v996
      %v1067 = vadd.f32 %v825, %v999
      %v1068 = vadd.f32 %v826, %v1001
      %v1069 = vadd.f32 %v827, %v1004
      %v1070 = vadd.f32 %v828, %v1006
      %v1071 = vunpack.c.l.bf16 %v473
      %v1072 = vunpack.c.h.bf16 %v473
      %v1073 = vlaneseq
      %v1074 = vshrl.u32 %v1073, 7
      %v1075 = vsub.s32 0, %v1074
      %v1076 = vrot.slane %v491, %v1075
      %v1077 = vmul.f32 %v506, %v1076
      %v1078 = vmul.f32 %v507, %v1076
      %v1079 = vmul.f32 %v508, %v1076
      %v1080 = vmul.f32 %v509, %v1076
      %v1081 = vmul.f32 %v510, %v1076
      %v1082 = vmul.f32 %v511, %v1076
      %v1083 = vmul.f32 %v512, %v1076
      %v1084 = vmul.f32 %v513, %v1076
      %v1085 = vmul.f32 %v514, %v1076
      %v1086 = vmul.f32 %v515, %v1076
      %v1087 = vmul.f32 %v516, %v1076
      %v1088 = vmul.f32 %v517, %v1076
      %v1089 = vmul.f32 %v518, %v1076
      %v1090 = vmul.f32 %v519, %v1076
      %v1091 = vmul.f32 %v520, %v1076
      %v1092 = vmul.f32 %v521, %v1076
      %v1093 = vmul.f32 %v522, %v1076
      %v1094 = vmul.f32 %v523, %v1076
      %v1095 = vmul.f32 %v524, %v1076
      %v1096 = vmul.f32 %v525, %v1076
      %v1097 = vmul.f32 %v526, %v1076
      %v1098 = vmul.f32 %v527, %v1076
      %v1099 = vmul.f32 %v528, %v1076
      %v1100 = vmul.f32 %v529, %v1076
      %v1101 = vmul.f32 %v530, %v1076
      %v1102 = vmul.f32 %v531, %v1076
      %v1103 = vmul.f32 %v532, %v1076
      %v1104 = vmul.f32 %v533, %v1076
      %v1105 = vmul.f32 %v534, %v1076
      %v1106 = vmul.f32 %v535, %v1076
      %v1107 = vmul.f32 %v1071, %v1076
      %v1108 = vmul.f32 %v1072, %v1076
      %v1109 = vadd.f32 %v1039, %v1077
      %v1110 = vadd.f32 %v1040, %v1078
      %v1111 = vadd.f32 %v1041, %v1079
      %v1112 = vadd.f32 %v1042, %v1080
      %v1113 = vadd.f32 %v1043, %v1081
      %v1114 = vadd.f32 %v1044, %v1082
      %v1115 = vadd.f32 %v1045, %v1083
      %v1116 = vadd.f32 %v1046, %v1084
      %v1117 = vadd.f32 %v1047, %v1085
      %v1118 = vadd.f32 %v1048, %v1086
      %v1119 = vadd.f32 %v1049, %v1087
      %v1120 = vadd.f32 %v1050, %v1088
      %v1121 = vadd.f32 %v1051, %v1089
      %v1122 = vadd.f32 %v1052, %v1090
      %v1123 = vadd.f32 %v1053, %v1091
      %v1124 = vadd.f32 %v1054, %v1092
      %v1125 = vadd.f32 %v1055, %v1093
      %v1126 = vadd.f32 %v1056, %v1094
      %v1127 = vadd.f32 %v1057, %v1095
      %v1128 = vadd.f32 %v1058, %v1096
      %v1129 = vadd.f32 %v1059, %v1097
      %v1130 = vadd.f32 %v1060, %v1098
      %v1131 = vadd.f32 %v1061, %v1099
      %v1132 = vadd.f32 %v1062, %v1100
      %v1133 = vadd.f32 %v1063, %v1101
      %v1134 = vadd.f32 %v1064, %v1102
      %v1135 = vadd.f32 %v1065, %v1103
      %v1136 = vadd.f32 %v1066, %v1104
      %v1137 = vadd.f32 %v1067, %v1105
      %v1138 = vadd.f32 %v1068, %v1106
      %v1139 = vadd.f32 %v1069, %v1107
      %v1140 = vadd.f32 %v1070, %v1108
      %v1141 = vunpack.c.l.bf16 %v489
      %v1142 = vlaneseq
      %v1143 = vshrl.u32 %v1142, 7
      %v1144 = vsub.s32 1, %v1143
      %v1145 = vrot.slane %v491, %v1144
      %v1146 = vmul.f32 %v506, %v1145
      %v1147 = vmul.f32 %v507, %v1145
      %v1148 = vmul.f32 %v572, %v1145
      %v1149 = vmul.f32 %v508, %v1145
      %v1150 = vmul.f32 %v509, %v1145
      %v1151 = vmul.f32 %v573, %v1145
      %v1152 = vmul.f32 %v510, %v1145
      %v1153 = vmul.f32 %v511, %v1145
      %v1154 = vmul.f32 %v574, %v1145
      %v1155 = vmul.f32 %v512, %v1145
      %v1156 = vmul.f32 %v513, %v1145
      %v1157 = vmul.f32 %v575, %v1145
      %v1158 = vmul.f32 %v514, %v1145
      %v1159 = vmul.f32 %v515, %v1145
      %v1160 = vmul.f32 %v576, %v1145
      %v1161 = vmul.f32 %v516, %v1145
      %v1162 = vmul.f32 %v517, %v1145
      %v1163 = vmul.f32 %v577, %v1145
      %v1164 = vmul.f32 %v518, %v1145
      %v1165 = vmul.f32 %v519, %v1145
      %v1166 = vmul.f32 %v578, %v1145
      %v1167 = vmul.f32 %v520, %v1145
      %v1168 = vmul.f32 %v521, %v1145
      %v1169 = vmul.f32 %v579, %v1145
      %v1170 = vmul.f32 %v522, %v1145
      %v1171 = vmul.f32 %v523, %v1145
      %v1172 = vmul.f32 %v580, %v1145
      %v1173 = vmul.f32 %v524, %v1145
      %v1174 = vmul.f32 %v525, %v1145
      %v1175 = vmul.f32 %v581, %v1145
      %v1176 = vmul.f32 %v526, %v1145
      %v1177 = vmul.f32 %v527, %v1145
      %v1178 = vmul.f32 %v582, %v1145
      %v1179 = vmul.f32 %v528, %v1145
      %v1180 = vmul.f32 %v529, %v1145
      %v1181 = vmul.f32 %v583, %v1145
      %v1182 = vmul.f32 %v530, %v1145
      %v1183 = vmul.f32 %v531, %v1145
      %v1184 = vmul.f32 %v584, %v1145
      %v1185 = vmul.f32 %v532, %v1145
      %v1186 = vmul.f32 %v533, %v1145
      %v1187 = vmul.f32 %v585, %v1145
      %v1188 = vmul.f32 %v534, %v1145
      %v1189 = vmul.f32 %v535, %v1145
      %v1190 = vmul.f32 %v586, %v1145
      %v1191 = vmul.f32 %v1071, %v1145
      %v1192 = vmul.f32 %v1072, %v1145
      %v1193 = vmul.f32 %v1141, %v1145
      %v1242 = vrot.slane %v1146, 1
      %v1243 = vrot.slane %v1147, 1
      %v1244 = vsel %vm685, %v1242, %v1243
      %v1245 = vrot.slane %v1148, 1
      %v1246 = vsel %vm685, %v1243, %v1245
      %v1247 = vrot.slane %v1149, 1
      %v1248 = vrot.slane %v1150, 1
      %v1249 = vsel %vm685, %v1247, %v1248
      %v1250 = vrot.slane %v1151, 1
      %v1251 = vsel %vm685, %v1248, %v1250
      %v1252 = vrot.slane %v1152, 1
      %v1253 = vrot.slane %v1153, 1
      %v1254 = vsel %vm685, %v1252, %v1253
      %v1255 = vrot.slane %v1154, 1
      %v1256 = vsel %vm685, %v1253, %v1255
      %v1257 = vrot.slane %v1155, 1
      %v1258 = vrot.slane %v1156, 1
      %v1259 = vsel %vm685, %v1257, %v1258
      %v1260 = vrot.slane %v1157, 1
      %v1261 = vsel %vm685, %v1258, %v1260
      %v1262 = vrot.slane %v1158, 1
      %v1263 = vrot.slane %v1159, 1
      %v1264 = vsel %vm685, %v1262, %v1263
      %v1265 = vrot.slane %v1160, 1
      %v1266 = vsel %vm685, %v1263, %v1265
      %v1267 = vrot.slane %v1161, 1
      %v1268 = vrot.slane %v1162, 1
      %v1269 = vsel %vm685, %v1267, %v1268
      %v1270 = vrot.slane %v1163, 1
      %v1271 = vsel %vm685, %v1268, %v1270
      %v1272 = vrot.slane %v1164, 1
      %v1273 = vrot.slane %v1165, 1
      %v1274 = vsel %vm685, %v1272, %v1273
      %v1275 = vrot.slane %v1166, 1
      %v1276 = vsel %vm685, %v1273, %v1275
      %v1277 = vrot.slane %v1167, 1
      %v1278 = vrot.slane %v1168, 1
      %v1279 = vsel %vm685, %v1277, %v1278
      %v1280 = vrot.slane %v1169, 1
      %v1281 = vsel %vm685, %v1278, %v1280
      %v1282 = vrot.slane %v1170, 1
      %v1283 = vrot.slane %v1171, 1
      %v1284 = vsel %vm685, %v1282, %v1283
      %v1285 = vrot.slane %v1172, 1
      %v1286 = vsel %vm685, %v1283, %v1285
      %v1287 = vrot.slane %v1173, 1
      %v1288 = vrot.slane %v1174, 1
      %v1289 = vsel %vm685, %v1287, %v1288
      %v1290 = vrot.slane %v1175, 1
      %v1291 = vsel %vm685, %v1288, %v1290
      %v1292 = vrot.slane %v1176, 1
      %v1293 = vrot.slane %v1177, 1
      %v1294 = vsel %vm685, %v1292, %v1293
      %v1295 = vrot.slane %v1178, 1
      %v1296 = vsel %vm685, %v1293, %v1295
      %v1297 = vrot.slane %v1179, 1
      %v1298 = vrot.slane %v1180, 1
      %v1299 = vsel %vm685, %v1297, %v1298
      %v1300 = vrot.slane %v1181, 1
      %v1301 = vsel %vm685, %v1298, %v1300
      %v1302 = vrot.slane %v1182, 1
      %v1303 = vrot.slane %v1183, 1
      %v1304 = vsel %vm685, %v1302, %v1303
      %v1305 = vrot.slane %v1184, 1
      %v1306 = vsel %vm685, %v1303, %v1305
      %v1307 = vrot.slane %v1185, 1
      %v1308 = vrot.slane %v1186, 1
      %v1309 = vsel %vm685, %v1307, %v1308
      %v1310 = vrot.slane %v1187, 1
      %v1311 = vsel %vm685, %v1308, %v1310
      %v1312 = vrot.slane %v1188, 1
      %v1313 = vrot.slane %v1189, 1
      %v1314 = vsel %vm685, %v1312, %v1313
      %v1315 = vrot.slane %v1190, 1
      %v1316 = vsel %vm685, %v1313, %v1315
      %v1317 = vrot.slane %v1191, 1
      %v1318 = vrot.slane %v1192, 1
      %v1319 = vsel %vm685, %v1317, %v1318
      %v1320 = vrot.slane %v1193, 1
      %v1321 = vsel %vm685, %v1318, %v1320
      %v1354 = vadd.f32 %v1109, %v1244
      %v1355 = vadd.f32 %v1110, %v1246
      %v1356 = vadd.f32 %v1111, %v1249
      %v1357 = vadd.f32 %v1112, %v1251
      %v1358 = vadd.f32 %v1113, %v1254
      %v1359 = vadd.f32 %v1114, %v1256
      %v1360 = vadd.f32 %v1115, %v1259
      %v1361 = vadd.f32 %v1116, %v1261
      %v1362 = vadd.f32 %v1117, %v1264
      %v1363 = vadd.f32 %v1118, %v1266
      %v1364 = vadd.f32 %v1119, %v1269
      %v1365 = vadd.f32 %v1120, %v1271
      %v1366 = vadd.f32 %v1121, %v1274
      %v1367 = vadd.f32 %v1122, %v1276
      %v1368 = vadd.f32 %v1123, %v1279
      %v1369 = vadd.f32 %v1124, %v1281
      %v1370 = vadd.f32 %v1125, %v1284
      %v1371 = vadd.f32 %v1126, %v1286
      %v1372 = vadd.f32 %v1127, %v1289
      %v1373 = vadd.f32 %v1128, %v1291
      %v1374 = vadd.f32 %v1129, %v1294
      %v1375 = vadd.f32 %v1130, %v1296
      %v1376 = vadd.f32 %v1131, %v1299
      %v1377 = vadd.f32 %v1132, %v1301
      %v1378 = vadd.f32 %v1133, %v1304
      %v1379 = vadd.f32 %v1134, %v1306
      %v1380 = vadd.f32 %v1135, %v1309
      %v1381 = vadd.f32 %v1136, %v1311
      %v1382 = vadd.f32 %v1137, %v1314
      %v1383 = vadd.f32 %v1138, %v1316
      %v1384 = vadd.f32 %v1139, %v1319
      %v1385 = vadd.f32 %v1140, %v1321
      %v1386 = vlaneseq
      %v1387 = vshrl.u32 %v1386, 7
      %v1388 = vsub.s32 2, %v1387
      %v1389 = vrot.slane %v491, %v1388
      %v1390 = vmul.f32 %v506, %v1389
      %v1391 = vmul.f32 %v507, %v1389
      %v1392 = vmul.f32 %v572, %v1389
      %v1393 = vmul.f32 %v508, %v1389
      %v1394 = vmul.f32 %v509, %v1389
      %v1395 = vmul.f32 %v573, %v1389
      %v1396 = vmul.f32 %v510, %v1389
      %v1397 = vmul.f32 %v511, %v1389
      %v1398 = vmul.f32 %v574, %v1389
      %v1399 = vmul.f32 %v512, %v1389
      %v1400 = vmul.f32 %v513, %v1389
      %v1401 = vmul.f32 %v575, %v1389
      %v1402 = vmul.f32 %v514, %v1389
      %v1403 = vmul.f32 %v515, %v1389
      %v1404 = vmul.f32 %v576, %v1389
      %v1405 = vmul.f32 %v516, %v1389
      %v1406 = vmul.f32 %v517, %v1389
      %v1407 = vmul.f32 %v577, %v1389
      %v1408 = vmul.f32 %v518, %v1389
      %v1409 = vmul.f32 %v519, %v1389
      %v1410 = vmul.f32 %v578, %v1389
      %v1411 = vmul.f32 %v520, %v1389
      %v1412 = vmul.f32 %v521, %v1389
      %v1413 = vmul.f32 %v579, %v1389
      %v1414 = vmul.f32 %v522, %v1389
      %v1415 = vmul.f32 %v523, %v1389
      %v1416 = vmul.f32 %v580, %v1389
      %v1417 = vmul.f32 %v524, %v1389
      %v1418 = vmul.f32 %v525, %v1389
      %v1419 = vmul.f32 %v581, %v1389
      %v1420 = vmul.f32 %v526, %v1389
      %v1421 = vmul.f32 %v527, %v1389
      %v1422 = vmul.f32 %v582, %v1389
      %v1423 = vmul.f32 %v528, %v1389
      %v1424 = vmul.f32 %v529, %v1389
      %v1425 = vmul.f32 %v583, %v1389
      %v1426 = vmul.f32 %v530, %v1389
      %v1427 = vmul.f32 %v531, %v1389
      %v1428 = vmul.f32 %v584, %v1389
      %v1429 = vmul.f32 %v532, %v1389
      %v1430 = vmul.f32 %v533, %v1389
      %v1431 = vmul.f32 %v585, %v1389
      %v1432 = vmul.f32 %v534, %v1389
      %v1433 = vmul.f32 %v535, %v1389
      %v1434 = vmul.f32 %v586, %v1389
      %v1435 = vmul.f32 %v1071, %v1389
      %v1436 = vmul.f32 %v1072, %v1389
      %v1437 = vmul.f32 %v1141, %v1389
      %v1486 = vrot.slane %v1390, 2
      %v1487 = vrot.slane %v1391, 2
      %v1488 = vsel %vm927, %v1486, %v1487
      %v1489 = vrot.slane %v1392, 2
      %v1490 = vsel %vm927, %v1487, %v1489
      %v1491 = vrot.slane %v1393, 2
      %v1492 = vrot.slane %v1394, 2
      %v1493 = vsel %vm927, %v1491, %v1492
      %v1494 = vrot.slane %v1395, 2
      %v1495 = vsel %vm927, %v1492, %v1494
      %v1496 = vrot.slane %v1396, 2
      %v1497 = vrot.slane %v1397, 2
      %v1498 = vsel %vm927, %v1496, %v1497
      %v1499 = vrot.slane %v1398, 2
      %v1500 = vsel %vm927, %v1497, %v1499
      %v1501 = vrot.slane %v1399, 2
      %v1502 = vrot.slane %v1400, 2
      %v1503 = vsel %vm927, %v1501, %v1502
      %v1504 = vrot.slane %v1401, 2
      %v1505 = vsel %vm927, %v1502, %v1504
      %v1506 = vrot.slane %v1402, 2
      %v1507 = vrot.slane %v1403, 2
      %v1508 = vsel %vm927, %v1506, %v1507
      %v1509 = vrot.slane %v1404, 2
      %v1510 = vsel %vm927, %v1507, %v1509
      %v1511 = vrot.slane %v1405, 2
      %v1512 = vrot.slane %v1406, 2
      %v1513 = vsel %vm927, %v1511, %v1512
      %v1514 = vrot.slane %v1407, 2
      %v1515 = vsel %vm927, %v1512, %v1514
      %v1516 = vrot.slane %v1408, 2
      %v1517 = vrot.slane %v1409, 2
      %v1518 = vsel %vm927, %v1516, %v1517
      %v1519 = vrot.slane %v1410, 2
      %v1520 = vsel %vm927, %v1517, %v1519
      %v1521 = vrot.slane %v1411, 2
      %v1522 = vrot.slane %v1412, 2
      %v1523 = vsel %vm927, %v1521, %v1522
      %v1524 = vrot.slane %v1413, 2
      %v1525 = vsel %vm927, %v1522, %v1524
      %v1526 = vrot.slane %v1414, 2
      %v1527 = vrot.slane %v1415, 2
      %v1528 = vsel %vm927, %v1526, %v1527
      %v1529 = vrot.slane %v1416, 2
      %v1530 = vsel %vm927, %v1527, %v1529
      %v1531 = vrot.slane %v1417, 2
      %v1532 = vrot.slane %v1418, 2
      %v1533 = vsel %vm927, %v1531, %v1532
      %v1534 = vrot.slane %v1419, 2
      %v1535 = vsel %vm927, %v1532, %v1534
      %v1536 = vrot.slane %v1420, 2
      %v1537 = vrot.slane %v1421, 2
      %v1538 = vsel %vm927, %v1536, %v1537
      %v1539 = vrot.slane %v1422, 2
      %v1540 = vsel %vm927, %v1537, %v1539
      %v1541 = vrot.slane %v1423, 2
      %v1542 = vrot.slane %v1424, 2
      %v1543 = vsel %vm927, %v1541, %v1542
      %v1544 = vrot.slane %v1425, 2
      %v1545 = vsel %vm927, %v1542, %v1544
      %v1546 = vrot.slane %v1426, 2
      %v1547 = vrot.slane %v1427, 2
      %v1548 = vsel %vm927, %v1546, %v1547
      %v1549 = vrot.slane %v1428, 2
      %v1550 = vsel %vm927, %v1547, %v1549
      %v1551 = vrot.slane %v1429, 2
      %v1552 = vrot.slane %v1430, 2
      %v1553 = vsel %vm927, %v1551, %v1552
      %v1554 = vrot.slane %v1431, 2
      %v1555 = vsel %vm927, %v1552, %v1554
      %v1556 = vrot.slane %v1432, 2
      %v1557 = vrot.slane %v1433, 2
      %v1558 = vsel %vm927, %v1556, %v1557
      %v1559 = vrot.slane %v1434, 2
      %v1560 = vsel %vm927, %v1557, %v1559
      %v1561 = vrot.slane %v1435, 2
      %v1562 = vrot.slane %v1436, 2
      %v1563 = vsel %vm927, %v1561, %v1562
      %v1564 = vrot.slane %v1437, 2
      %v1565 = vsel %vm927, %v1562, %v1564
      %v1598 = vadd.f32 %v1354, %v1488
      %v1599 = vadd.f32 %v1355, %v1490
      %v1600 = vadd.f32 %v1356, %v1493
      %v1601 = vadd.f32 %v1357, %v1495
      %v1602 = vadd.f32 %v1358, %v1498
      %v1603 = vadd.f32 %v1359, %v1500
      %v1604 = vadd.f32 %v1360, %v1503
      %v1605 = vadd.f32 %v1361, %v1505
      %v1606 = vadd.f32 %v1362, %v1508
      %v1607 = vadd.f32 %v1363, %v1510
      %v1608 = vadd.f32 %v1364, %v1513
      %v1609 = vadd.f32 %v1365, %v1515
      %v1610 = vadd.f32 %v1366, %v1518
      %v1611 = vadd.f32 %v1367, %v1520
      %v1612 = vadd.f32 %v1368, %v1523
      %v1613 = vadd.f32 %v1369, %v1525
      %v1614 = vadd.f32 %v1370, %v1528
      %v1615 = vadd.f32 %v1371, %v1530
      %v1616 = vadd.f32 %v1372, %v1533
      %v1617 = vadd.f32 %v1373, %v1535
      %v1618 = vadd.f32 %v1374, %v1538
      %v1619 = vadd.f32 %v1375, %v1540
      %v1620 = vadd.f32 %v1376, %v1543
      %v1621 = vadd.f32 %v1377, %v1545
      %v1622 = vadd.f32 %v1378, %v1548
      %v1623 = vadd.f32 %v1379, %v1550
      %v1624 = vadd.f32 %v1380, %v1553
      %v1625 = vadd.f32 %v1381, %v1555
      %v1626 = vadd.f32 %v1382, %v1558
      %v1627 = vadd.f32 %v1383, %v1560
      %v1628 = vadd.f32 %v1384, %v1563
      %v1629 = vadd.f32 %v1385, %v1565
      %v1630 = vlaneseq
      %v1631 = vshrl.u32 %v1630, 7
      %v1632 = vsub.s32 0, %v1631
      %v1633 = vrot.slane %v492, %v1632
      %v1634 = vmul.f32 %v508, %v1633
      %v1635 = vmul.f32 %v509, %v1633
      %v1636 = vmul.f32 %v510, %v1633
      %v1637 = vmul.f32 %v511, %v1633
      %v1638 = vmul.f32 %v512, %v1633
      %v1639 = vmul.f32 %v513, %v1633
      %v1640 = vmul.f32 %v514, %v1633
      %v1641 = vmul.f32 %v515, %v1633
      %v1642 = vmul.f32 %v516, %v1633
      %v1643 = vmul.f32 %v517, %v1633
      %v1644 = vmul.f32 %v518, %v1633
      %v1645 = vmul.f32 %v519, %v1633
      %v1646 = vmul.f32 %v520, %v1633
      %v1647 = vmul.f32 %v521, %v1633
      %v1648 = vmul.f32 %v522, %v1633
      %v1649 = vmul.f32 %v523, %v1633
      %v1650 = vmul.f32 %v524, %v1633
      %v1651 = vmul.f32 %v525, %v1633
      %v1652 = vmul.f32 %v526, %v1633
      %v1653 = vmul.f32 %v527, %v1633
      %v1654 = vmul.f32 %v528, %v1633
      %v1655 = vmul.f32 %v529, %v1633
      %v1656 = vmul.f32 %v530, %v1633
      %v1657 = vmul.f32 %v531, %v1633
      %v1658 = vmul.f32 %v532, %v1633
      %v1659 = vmul.f32 %v533, %v1633
      %v1660 = vmul.f32 %v534, %v1633
      %v1661 = vmul.f32 %v535, %v1633
      %v1662 = vmul.f32 %v1071, %v1633
      %v1663 = vmul.f32 %v1072, %v1633
      %v1664 = vmul.f32 %v504, %v1633
      %v1665 = vmul.f32 %v505, %v1633
      %v1666 = vadd.f32 %v1598, %v1634
      %v1667 = vadd.f32 %v1599, %v1635
      %v1668 = vadd.f32 %v1600, %v1636
      %v1669 = vadd.f32 %v1601, %v1637
      %v1670 = vadd.f32 %v1602, %v1638
      %v1671 = vadd.f32 %v1603, %v1639
      %v1672 = vadd.f32 %v1604, %v1640
      %v1673 = vadd.f32 %v1605, %v1641
      %v1674 = vadd.f32 %v1606, %v1642
      %v1675 = vadd.f32 %v1607, %v1643
      %v1676 = vadd.f32 %v1608, %v1644
      %v1677 = vadd.f32 %v1609, %v1645
      %v1678 = vadd.f32 %v1610, %v1646
      %v1679 = vadd.f32 %v1611, %v1647
      %v1680 = vadd.f32 %v1612, %v1648
      %v1681 = vadd.f32 %v1613, %v1649
      %v1682 = vadd.f32 %v1614, %v1650
      %v1683 = vadd.f32 %v1615, %v1651
      %v1684 = vadd.f32 %v1616, %v1652
      %v1685 = vadd.f32 %v1617, %v1653
      %v1686 = vadd.f32 %v1618, %v1654
      %v1687 = vadd.f32 %v1619, %v1655
      %v1688 = vadd.f32 %v1620, %v1656
      %v1689 = vadd.f32 %v1621, %v1657
      %v1690 = vadd.f32 %v1622, %v1658
      %v1691 = vadd.f32 %v1623, %v1659
      %v1692 = vadd.f32 %v1624, %v1660
      %v1693 = vadd.f32 %v1625, %v1661
      %v1694 = vadd.f32 %v1626, %v1662
      %v1695 = vadd.f32 %v1627, %v1663
      %v1696 = vadd.f32 %v1628, %v1664
      %v1697 = vadd.f32 %v1629, %v1665
      %v1698 = vlaneseq
      %v1699 = vshrl.u32 %v1698, 7
      %v1700 = vsub.s32 1, %v1699
      %v1701 = vrot.slane %v492, %v1700
      %v1702 = vmul.f32 %v508, %v1701
      %v1703 = vmul.f32 %v509, %v1701
      %v1704 = vmul.f32 %v573, %v1701
      %v1705 = vmul.f32 %v510, %v1701
      %v1706 = vmul.f32 %v511, %v1701
      %v1707 = vmul.f32 %v574, %v1701
      %v1708 = vmul.f32 %v512, %v1701
      %v1709 = vmul.f32 %v513, %v1701
      %v1710 = vmul.f32 %v575, %v1701
      %v1711 = vmul.f32 %v514, %v1701
      %v1712 = vmul.f32 %v515, %v1701
      %v1713 = vmul.f32 %v576, %v1701
      %v1714 = vmul.f32 %v516, %v1701
      %v1715 = vmul.f32 %v517, %v1701
      %v1716 = vmul.f32 %v577, %v1701
      %v1717 = vmul.f32 %v518, %v1701
      %v1718 = vmul.f32 %v519, %v1701
      %v1719 = vmul.f32 %v578, %v1701
      %v1720 = vmul.f32 %v520, %v1701
      %v1721 = vmul.f32 %v521, %v1701
      %v1722 = vmul.f32 %v579, %v1701
      %v1723 = vmul.f32 %v522, %v1701
      %v1724 = vmul.f32 %v523, %v1701
      %v1725 = vmul.f32 %v580, %v1701
      %v1726 = vmul.f32 %v524, %v1701
      %v1727 = vmul.f32 %v525, %v1701
      %v1728 = vmul.f32 %v581, %v1701
      %v1729 = vmul.f32 %v526, %v1701
      %v1730 = vmul.f32 %v527, %v1701
      %v1731 = vmul.f32 %v582, %v1701
      %v1732 = vmul.f32 %v528, %v1701
      %v1733 = vmul.f32 %v529, %v1701
      %v1734 = vmul.f32 %v583, %v1701
      %v1735 = vmul.f32 %v530, %v1701
      %v1736 = vmul.f32 %v531, %v1701
      %v1737 = vmul.f32 %v584, %v1701
      %v1738 = vmul.f32 %v532, %v1701
      %v1739 = vmul.f32 %v533, %v1701
      %v1740 = vmul.f32 %v585, %v1701
      %v1741 = vmul.f32 %v534, %v1701
      %v1742 = vmul.f32 %v535, %v1701
      %v1743 = vmul.f32 %v586, %v1701
      %v1744 = vmul.f32 %v1071, %v1701
      %v1745 = vmul.f32 %v1072, %v1701
      %v1746 = vmul.f32 %v1141, %v1701
      %v1747 = vmul.f32 %v504, %v1701
      %v1748 = vmul.f32 %v505, %v1701
      %v1796 = vrot.slane %v1702, 1
      %v1797 = vrot.slane %v1703, 1
      %v1798 = vsel %vm685, %v1796, %v1797
      %v1799 = vrot.slane %v1704, 1
      %v1800 = vsel %vm685, %v1797, %v1799
      %v1801 = vrot.slane %v1705, 1
      %v1802 = vrot.slane %v1706, 1
      %v1803 = vsel %vm685, %v1801, %v1802
      %v1804 = vrot.slane %v1707, 1
      %v1805 = vsel %vm685, %v1802, %v1804
      %v1806 = vrot.slane %v1708, 1
      %v1807 = vrot.slane %v1709, 1
      %v1808 = vsel %vm685, %v1806, %v1807
      %v1809 = vrot.slane %v1710, 1
      %v1810 = vsel %vm685, %v1807, %v1809
      %v1811 = vrot.slane %v1711, 1
      %v1812 = vrot.slane %v1712, 1
      %v1813 = vsel %vm685, %v1811, %v1812
      %v1814 = vrot.slane %v1713, 1
      %v1815 = vsel %vm685, %v1812, %v1814
      %v1816 = vrot.slane %v1714, 1
      %v1817 = vrot.slane %v1715, 1
      %v1818 = vsel %vm685, %v1816, %v1817
      %v1819 = vrot.slane %v1716, 1
      %v1820 = vsel %vm685, %v1817, %v1819
      %v1821 = vrot.slane %v1717, 1
      %v1822 = vrot.slane %v1718, 1
      %v1823 = vsel %vm685, %v1821, %v1822
      %v1824 = vrot.slane %v1719, 1
      %v1825 = vsel %vm685, %v1822, %v1824
      %v1826 = vrot.slane %v1720, 1
      %v1827 = vrot.slane %v1721, 1
      %v1828 = vsel %vm685, %v1826, %v1827
      %v1829 = vrot.slane %v1722, 1
      %v1830 = vsel %vm685, %v1827, %v1829
      %v1831 = vrot.slane %v1723, 1
      %v1832 = vrot.slane %v1724, 1
      %v1833 = vsel %vm685, %v1831, %v1832
      %v1834 = vrot.slane %v1725, 1
      %v1835 = vsel %vm685, %v1832, %v1834
      %v1836 = vrot.slane %v1726, 1
      %v1837 = vrot.slane %v1727, 1
      %v1838 = vsel %vm685, %v1836, %v1837
      %v1839 = vrot.slane %v1728, 1
      %v1840 = vsel %vm685, %v1837, %v1839
      %v1841 = vrot.slane %v1729, 1
      %v1842 = vrot.slane %v1730, 1
      %v1843 = vsel %vm685, %v1841, %v1842
      %v1844 = vrot.slane %v1731, 1
      %v1845 = vsel %vm685, %v1842, %v1844
      %v1846 = vrot.slane %v1732, 1
      %v1847 = vrot.slane %v1733, 1
      %v1848 = vsel %vm685, %v1846, %v1847
      %v1849 = vrot.slane %v1734, 1
      %v1850 = vsel %vm685, %v1847, %v1849
      %v1851 = vrot.slane %v1735, 1
      %v1852 = vrot.slane %v1736, 1
      %v1853 = vsel %vm685, %v1851, %v1852
      %v1854 = vrot.slane %v1737, 1
      %v1855 = vsel %vm685, %v1852, %v1854
      %v1856 = vrot.slane %v1738, 1
      %v1857 = vrot.slane %v1739, 1
      %v1858 = vsel %vm685, %v1856, %v1857
      %v1859 = vrot.slane %v1740, 1
      %v1860 = vsel %vm685, %v1857, %v1859
      %v1861 = vrot.slane %v1741, 1
      %v1862 = vrot.slane %v1742, 1
      %v1863 = vsel %vm685, %v1861, %v1862
      %v1864 = vrot.slane %v1743, 1
      %v1865 = vsel %vm685, %v1862, %v1864
      %v1866 = vrot.slane %v1744, 1
      %v1867 = vrot.slane %v1745, 1
      %v1868 = vsel %vm685, %v1866, %v1867
      %v1869 = vrot.slane %v1746, 1
      %v1870 = vsel %vm685, %v1867, %v1869
      %v1871 = vrot.slane %v1747, 1
      %v1872 = vrot.slane %v1748, 1
      %v1873 = vsel %vm685, %v1871, %v1872
      %v1874 = vsel %vm685, %v1872, %v1871
      %v1907 = vadd.f32 %v1666, %v1798
      %v1908 = vadd.f32 %v1667, %v1800
      %v1909 = vadd.f32 %v1668, %v1803
      %v1910 = vadd.f32 %v1669, %v1805
      %v1911 = vadd.f32 %v1670, %v1808
      %v1912 = vadd.f32 %v1671, %v1810
      %v1913 = vadd.f32 %v1672, %v1813
      %v1914 = vadd.f32 %v1673, %v1815
      %v1915 = vadd.f32 %v1674, %v1818
      %v1916 = vadd.f32 %v1675, %v1820
      %v1917 = vadd.f32 %v1676, %v1823
      %v1918 = vadd.f32 %v1677, %v1825
      %v1919 = vadd.f32 %v1678, %v1828
      %v1920 = vadd.f32 %v1679, %v1830
      %v1921 = vadd.f32 %v1680, %v1833
      %v1922 = vadd.f32 %v1681, %v1835
      %v1923 = vadd.f32 %v1682, %v1838
      %v1924 = vadd.f32 %v1683, %v1840
      %v1925 = vadd.f32 %v1684, %v1843
      %v1926 = vadd.f32 %v1685, %v1845
      %v1927 = vadd.f32 %v1686, %v1848
      %v1928 = vadd.f32 %v1687, %v1850
      %v1929 = vadd.f32 %v1688, %v1853
      %v1930 = vadd.f32 %v1689, %v1855
      %v1931 = vadd.f32 %v1690, %v1858
      %v1932 = vadd.f32 %v1691, %v1860
      %v1933 = vadd.f32 %v1692, %v1863
      %v1934 = vadd.f32 %v1693, %v1865
      %v1935 = vadd.f32 %v1694, %v1868
      %v1936 = vadd.f32 %v1695, %v1870
      %v1937 = vadd.f32 %v1696, %v1873
      %v1938 = vadd.f32 %v1697, %v1874
      %v1939 = vlaneseq
      %v1940 = vshrl.u32 %v1939, 7
      %v1941 = vsub.s32 2, %v1940
      %v1942 = vrot.slane %v492, %v1941
      %v1943 = vmul.f32 %v508, %v1942
      %v1944 = vmul.f32 %v509, %v1942
      %v1945 = vmul.f32 %v573, %v1942
      %v1946 = vmul.f32 %v510, %v1942
      %v1947 = vmul.f32 %v511, %v1942
      %v1948 = vmul.f32 %v574, %v1942
      %v1949 = vmul.f32 %v512, %v1942
      %v1950 = vmul.f32 %v513, %v1942
      %v1951 = vmul.f32 %v575, %v1942
      %v1952 = vmul.f32 %v514, %v1942
      %v1953 = vmul.f32 %v515, %v1942
      %v1954 = vmul.f32 %v576, %v1942
      %v1955 = vmul.f32 %v516, %v1942
      %v1956 = vmul.f32 %v517, %v1942
      %v1957 = vmul.f32 %v577, %v1942
      %v1958 = vmul.f32 %v518, %v1942
      %v1959 = vmul.f32 %v519, %v1942
      %v1960 = vmul.f32 %v578, %v1942
      %v1961 = vmul.f32 %v520, %v1942
      %v1962 = vmul.f32 %v521, %v1942
      %v1963 = vmul.f32 %v579, %v1942
      %v1964 = vmul.f32 %v522, %v1942
      %v1965 = vmul.f32 %v523, %v1942
      %v1966 = vmul.f32 %v580, %v1942
      %v1967 = vmul.f32 %v524, %v1942
      %v1968 = vmul.f32 %v525, %v1942
      %v1969 = vmul.f32 %v581, %v1942
      %v1970 = vmul.f32 %v526, %v1942
      %v1971 = vmul.f32 %v527, %v1942
      %v1972 = vmul.f32 %v582, %v1942
      %v1973 = vmul.f32 %v528, %v1942
      %v1974 = vmul.f32 %v529, %v1942
      %v1975 = vmul.f32 %v583, %v1942
      %v1976 = vmul.f32 %v530, %v1942
      %v1977 = vmul.f32 %v531, %v1942
      %v1978 = vmul.f32 %v584, %v1942
      %v1979 = vmul.f32 %v532, %v1942
      %v1980 = vmul.f32 %v533, %v1942
      %v1981 = vmul.f32 %v585, %v1942
      %v1982 = vmul.f32 %v534, %v1942
      %v1983 = vmul.f32 %v535, %v1942
      %v1984 = vmul.f32 %v586, %v1942
      %v1985 = vmul.f32 %v1071, %v1942
      %v1986 = vmul.f32 %v1072, %v1942
      %v1987 = vmul.f32 %v1141, %v1942
      %v1988 = vmul.f32 %v504, %v1942
      %v1989 = vmul.f32 %v505, %v1942
      %v2037 = vrot.slane %v1943, 2
      %v2038 = vrot.slane %v1944, 2
      %v2039 = vsel %vm927, %v2037, %v2038
      %v2040 = vrot.slane %v1945, 2
      %v2041 = vsel %vm927, %v2038, %v2040
      %v2042 = vrot.slane %v1946, 2
      %v2043 = vrot.slane %v1947, 2
      %v2044 = vsel %vm927, %v2042, %v2043
      %v2045 = vrot.slane %v1948, 2
      %v2046 = vsel %vm927, %v2043, %v2045
      %v2047 = vrot.slane %v1949, 2
      %v2048 = vrot.slane %v1950, 2
      %v2049 = vsel %vm927, %v2047, %v2048
      %v2050 = vrot.slane %v1951, 2
      %v2051 = vsel %vm927, %v2048, %v2050
      %v2052 = vrot.slane %v1952, 2
      %v2053 = vrot.slane %v1953, 2
      %v2054 = vsel %vm927, %v2052, %v2053
      %v2055 = vrot.slane %v1954, 2
      %v2056 = vsel %vm927, %v2053, %v2055
      %v2057 = vrot.slane %v1955, 2
      %v2058 = vrot.slane %v1956, 2
      %v2059 = vsel %vm927, %v2057, %v2058
      %v2060 = vrot.slane %v1957, 2
      %v2061 = vsel %vm927, %v2058, %v2060
      %v2062 = vrot.slane %v1958, 2
      %v2063 = vrot.slane %v1959, 2
      %v2064 = vsel %vm927, %v2062, %v2063
      %v2065 = vrot.slane %v1960, 2
      %v2066 = vsel %vm927, %v2063, %v2065
      %v2067 = vrot.slane %v1961, 2
      %v2068 = vrot.slane %v1962, 2
      %v2069 = vsel %vm927, %v2067, %v2068
      %v2070 = vrot.slane %v1963, 2
      %v2071 = vsel %vm927, %v2068, %v2070
      %v2072 = vrot.slane %v1964, 2
      %v2073 = vrot.slane %v1965, 2
      %v2074 = vsel %vm927, %v2072, %v2073
      %v2075 = vrot.slane %v1966, 2
      %v2076 = vsel %vm927, %v2073, %v2075
      %v2077 = vrot.slane %v1967, 2
      %v2078 = vrot.slane %v1968, 2
      %v2079 = vsel %vm927, %v2077, %v2078
      %v2080 = vrot.slane %v1969, 2
      %v2081 = vsel %vm927, %v2078, %v2080
      %v2082 = vrot.slane %v1970, 2
      %v2083 = vrot.slane %v1971, 2
      %v2084 = vsel %vm927, %v2082, %v2083
      %v2085 = vrot.slane %v1972, 2
      %v2086 = vsel %vm927, %v2083, %v2085
      %v2087 = vrot.slane %v1973, 2
      %v2088 = vrot.slane %v1974, 2
      %v2089 = vsel %vm927, %v2087, %v2088
      %v2090 = vrot.slane %v1975, 2
      %v2091 = vsel %vm927, %v2088, %v2090
      %v2092 = vrot.slane %v1976, 2
      %v2093 = vrot.slane %v1977, 2
      %v2094 = vsel %vm927, %v2092, %v2093
      %v2095 = vrot.slane %v1978, 2
      %v2096 = vsel %vm927, %v2093, %v2095
      %v2097 = vrot.slane %v1979, 2
      %v2098 = vrot.slane %v1980, 2
      %v2099 = vsel %vm927, %v2097, %v2098
      %v2100 = vrot.slane %v1981, 2
      %v2101 = vsel %vm927, %v2098, %v2100
      %v2102 = vrot.slane %v1982, 2
      %v2103 = vrot.slane %v1983, 2
      %v2104 = vsel %vm927, %v2102, %v2103
      %v2105 = vrot.slane %v1984, 2
      %v2106 = vsel %vm927, %v2103, %v2105
      %v2107 = vrot.slane %v1985, 2
      %v2108 = vrot.slane %v1986, 2
      %v2109 = vsel %vm927, %v2107, %v2108
      %v2110 = vrot.slane %v1987, 2
      %v2111 = vsel %vm927, %v2108, %v2110
      %v2112 = vrot.slane %v1988, 2
      %v2113 = vrot.slane %v1989, 2
      %v2114 = vsel %vm927, %v2112, %v2113
      %v2115 = vsel %vm927, %v2113, %v2112
      %v2148 = vadd.f32 %v1907, %v2039
      %v2149 = vadd.f32 %v1908, %v2041
      %v2150 = vadd.f32 %v1909, %v2044
      %v2151 = vadd.f32 %v1910, %v2046
      %v2152 = vadd.f32 %v1911, %v2049
      %v2153 = vadd.f32 %v1912, %v2051
      %v2154 = vadd.f32 %v1913, %v2054
      %v2155 = vadd.f32 %v1914, %v2056
      %v2156 = vadd.f32 %v1915, %v2059
      %v2157 = vadd.f32 %v1916, %v2061
      %v2158 = vadd.f32 %v1917, %v2064
      %v2159 = vadd.f32 %v1918, %v2066
      %v2160 = vadd.f32 %v1919, %v2069
      %v2161 = vadd.f32 %v1920, %v2071
      %v2162 = vadd.f32 %v1921, %v2074
      %v2163 = vadd.f32 %v1922, %v2076
      %v2164 = vadd.f32 %v1923, %v2079
      %v2165 = vadd.f32 %v1924, %v2081
      %v2166 = vadd.f32 %v1925, %v2084
      %v2167 = vadd.f32 %v1926, %v2086
      %v2168 = vadd.f32 %v1927, %v2089
      %v2169 = vadd.f32 %v1928, %v2091
      %v2170 = vadd.f32 %v1929, %v2094
      %v2171 = vadd.f32 %v1930, %v2096
      %v2172 = vadd.f32 %v1931, %v2099
      %v2173 = vadd.f32 %v1932, %v2101
      %v2174 = vadd.f32 %v1933, %v2104
      %v2175 = vadd.f32 %v1934, %v2106
      %v2176 = vadd.f32 %v1935, %v2109
      %v2177 = vadd.f32 %v1936, %v2111
      %v2178 = vadd.f32 %v1937, %v2114
      %v2179 = vadd.f32 %v1938, %v2115
      %v2180 = vpack.c.bf16 %v2149, %v2148
      %v2181 = vpack.c.bf16 %v2151, %v2150
      %v2182 = vpack.c.bf16 %v2153, %v2152
      %v2183 = vpack.c.bf16 %v2155, %v2154
      %v2184 = vpack.c.bf16 %v2157, %v2156
      %v2185 = vpack.c.bf16 %v2159, %v2158
      %v2186 = vpack.c.bf16 %v2161, %v2160
      %v2187 = vpack.c.bf16 %v2163, %v2162
      %v2188 = vpack.c.bf16 %v2165, %v2164
      %v2189 = vpack.c.bf16 %v2167, %v2166
      %v2190 = vpack.c.bf16 %v2169, %v2168
      %v2191 = vpack.c.bf16 %v2171, %v2170
      %v2192 = vpack.c.bf16 %v2173, %v2172
      %v2193 = vpack.c.bf16 %v2175, %v2174
      %v2194 = vpack.c.bf16 %v2177, %v2176
      %v2195 = vpack.c.bf16 %v2179, %v2178
      %v2197 = vlaneseq
      %v2198 = vshrl.u32 %v2197, 7
      %v2199 = vsub.s32 0, %v2198
      %v2200 = vrot.slane %v494, %v2199
      %vm2202 = vcmask 31744
      %v2204 = vsel %vm2202, %v2180, 0
      %v2207 = vsel %vm2202, %v2181, 0
      %v2210 = vsel %vm2202, %v2182, 0
      %v2213 = vsel %vm2202, %v2183, 0
      %v2216 = vsel %vm2202, %v2184, 0
      %v2219 = vsel %vm2202, %v2185, 0
      %v2222 = vsel %vm2202, %v2186, 0
      %v2225 = vsel %vm2202, %v2187, 0
      %v2228 = vsel %vm2202, %v2188, 0
      %v2231 = vsel %vm2202, %v2189, 0
      %v2234 = vsel %vm2202, %v2190, 0
      %v2237 = vsel %vm2202, %v2191, 0
      %v2240 = vsel %vm2202, %v2192, 0
      %v2243 = vsel %vm2202, %v2193, 0
      %v2246 = vsel %vm2202, %v2194, 0
      %v2249 = vsel %vm2202, %v2195, 0
      %vm2251 = vcmask 1041408
      %v2253 = vsel %vm2251, %v493, 0
      %2255 = vmatprep.subr.bf16.mxu0 0
      %2256 = vmatpush1.bf16.msra.mxu0 %v2253
      %2257 = vmatprep.subr.bf16.mxu0 0
      %2258 = vmatpush1.bf16.msra.mxu0 0
      %2259 = vmatprep.subr.bf16.mxu0 0
      %2260 = vmatpush1.bf16.msra.mxu0 0
      %2261 = vmatprep.subr.bf16.mxu0 0
      %2262 = vmatpush1.bf16.msra.mxu0 0
      %2263 = vmatprep.subr.bf16.mxu0 0
      %2264 = vmatpush1.bf16.msra.mxu0 0
      %2265 = vmatprep.subr.bf16.mxu0 0
      %2266 = vmatpush1.bf16.msra.mxu0 0
      %2267 = vmatprep.subr.bf16.mxu0 0
      %2268 = vmatpush1.bf16.msra.mxu0 0
      %2269 = vmatprep.subr.bf16.mxu0 0
      %2270 = vmatpush1.bf16.msra.mxu0 0
      %2271 = vmatprep.subr.bf16.mxu0 0
      %2272 = vmatpush1.bf16.msra.mxu0 0
      %2273 = vmatprep.subr.bf16.mxu0 0
      %2274 = vmatpush1.bf16.msra.mxu0 0
      %2275 = vmatprep.subr.bf16.mxu0 0
      %2276 = vmatpush1.bf16.msra.mxu0 0
      %2277 = vmatprep.subr.bf16.mxu0 0
      %2278 = vmatpush1.bf16.msra.mxu0 0
      %2279 = vmatprep.subr.bf16.mxu0 0
      %2280 = vmatpush1.bf16.msra.mxu0 0
      %2281 = vmatprep.subr.bf16.mxu0 0
      %2282 = vmatpush1.bf16.msra.mxu0 0
      %2283 = vmatprep.subr.bf16.mxu0 0
      %2284 = vmatpush1.bf16.msra.mxu0 0
      %2285 = vmatprep.subr.bf16.mxu0 0
      %2286 = vmatpush1.bf16.msra.mxu0 0
      %2287 = vmatprep.mubr.bf16.mxu0 0
      %2288 = vmatmul.mubr.bf16.gmra.mrb[0].mxu0 %v2204
      %v2289 = vpop.f32.mrb[0].mxu0
      %v2290 = vadd.f32 %v2200, %v2289
      %v2291 = vpop.f32.mrb[0].mxu0
      %v2292 = vpop.f32.mrb[0].mxu0
      %v2293 = vadd.f32 %v2200, %v2292
      %v2294 = vpop.f32.mrb[0].mxu0
      %2295 = vmatprep.mubr.bf16.mxu0 0
      %2296 = vmatmul.mubr.bf16.gmra.mrb[0].mxu0 %v2207
      %v2297 = vpop.f32.mrb[0].mxu0
      %v2298 = vadd.f32 %v2200, %v2297
      %v2299 = vpop.f32.mrb[0].mxu0
      %v2300 = vpop.f32.mrb[0].mxu0
      %v2301 = vadd.f32 %v2200, %v2300
      %v2302 = vpop.f32.mrb[0].mxu0
      %2303 = vmatprep.mubr.bf16.mxu0 0
      %2304 = vmatmul.mubr.bf16.gmra.mrb[0].mxu0 %v2210
      %v2305 = vpop.f32.mrb[0].mxu0
      %v2306 = vadd.f32 %v2200, %v2305
      %v2307 = vpop.f32.mrb[0].mxu0
      %v2308 = vpop.f32.mrb[0].mxu0
      %v2309 = vadd.f32 %v2200, %v2308
      %v2310 = vpop.f32.mrb[0].mxu0
      %2311 = vmatprep.mubr.bf16.mxu0 0
      %2312 = vmatmul.mubr.bf16.gmra.mrb[0].mxu0 %v2213
      %v2313 = vpop.f32.mrb[0].mxu0
      %v2314 = vadd.f32 %v2200, %v2313
      %v2315 = vpop.f32.mrb[0].mxu0
      %v2316 = vpop.f32.mrb[0].mxu0
      %v2317 = vadd.f32 %v2200, %v2316
      %v2318 = vpop.f32.mrb[0].mxu0
      %2319 = vmatprep.mubr.bf16.mxu0 0
      %2320 = vmatmul.mubr.bf16.gmra.mrb[0].mxu0 %v2216
      %v2321 = vpop.f32.mrb[0].mxu0
      %v2322 = vadd.f32 %v2200, %v2321
      %v2323 = vpop.f32.mrb[0].mxu0
      %v2324 = vpop.f32.mrb[0].mxu0
      %v2325 = vadd.f32 %v2200, %v2324
      %v2326 = vpop.f32.mrb[0].mxu0
      %2327 = vmatprep.mubr.bf16.mxu0 0
      %2328 = vmatmul.mubr.bf16.gmra.mrb[0].mxu0 %v2219
      %v2329 = vpop.f32.mrb[0].mxu0
      %v2330 = vadd.f32 %v2200, %v2329
      %v2331 = vpop.f32.mrb[0].mxu0
      %v2332 = vpop.f32.mrb[0].mxu0
      %v2333 = vadd.f32 %v2200, %v2332
      %v2334 = vpop.f32.mrb[0].mxu0
      %2335 = vmatprep.mubr.bf16.mxu0 0
      %2336 = vmatmul.mubr.bf16.gmra.mrb[0].mxu0 %v2222
      %v2337 = vpop.f32.mrb[0].mxu0
      %v2338 = vadd.f32 %v2200, %v2337
      %v2339 = vpop.f32.mrb[0].mxu0
      %v2340 = vpop.f32.mrb[0].mxu0
      %v2341 = vadd.f32 %v2200, %v2340
      %v2342 = vpop.f32.mrb[0].mxu0
      %2343 = vmatprep.mubr.bf16.mxu0 0
      %2344 = vmatmul.mubr.bf16.gmra.mrb[0].mxu0 %v2225
      %v2345 = vpop.f32.mrb[0].mxu0
      %v2346 = vadd.f32 %v2200, %v2345
      %v2347 = vpop.f32.mrb[0].mxu0
      %v2348 = vpop.f32.mrb[0].mxu0
      %v2349 = vadd.f32 %v2200, %v2348
      %v2350 = vpop.f32.mrb[0].mxu0
      %2351 = vmatprep.mubr.bf16.mxu0 0
      %2352 = vmatmul.mubr.bf16.gmra.mrb[0].mxu0 %v2228
      %v2353 = vpop.f32.mrb[0].mxu0
      %v2354 = vadd.f32 %v2200, %v2353
      %v2355 = vpop.f32.mrb[0].mxu0
      %v2356 = vpop.f32.mrb[0].mxu0
      %v2357 = vadd.f32 %v2200, %v2356
      %v2358 = vpop.f32.mrb[0].mxu0
      %2359 = vmatprep.mubr.bf16.mxu0 0
      %2360 = vmatmul.mubr.bf16.gmra.mrb[0].mxu0 %v2231
      %v2361 = vpop.f32.mrb[0].mxu0
      %v2362 = vadd.f32 %v2200, %v2361
      %v2363 = vpop.f32.mrb[0].mxu0
      %v2364 = vpop.f32.mrb[0].mxu0
      %v2365 = vadd.f32 %v2200, %v2364
      %v2366 = vpop.f32.mrb[0].mxu0
      %2367 = vmatprep.mubr.bf16.mxu0 0
      %2368 = vmatmul.mubr.bf16.gmra.mrb[0].mxu0 %v2234
      %v2369 = vpop.f32.mrb[0].mxu0
      %v2370 = vadd.f32 %v2200, %v2369
      %v2371 = vpop.f32.mrb[0].mxu0
      %v2372 = vpop.f32.mrb[0].mxu0
      %v2373 = vadd.f32 %v2200, %v2372
      %v2374 = vpop.f32.mrb[0].mxu0
      %2375 = vmatprep.mubr.bf16.mxu0 0
      %2376 = vmatmul.mubr.bf16.gmra.mrb[0].mxu0 %v2237
      %v2377 = vpop.f32.mrb[0].mxu0
      %v2378 = vadd.f32 %v2200, %v2377
      %v2379 = vpop.f32.mrb[0].mxu0
      %v2380 = vpop.f32.mrb[0].mxu0
      %v2381 = vadd.f32 %v2200, %v2380
      %v2382 = vpop.f32.mrb[0].mxu0
      %2383 = vmatprep.mubr.bf16.mxu0 0
      %2384 = vmatmul.mubr.bf16.gmra.mrb[0].mxu0 %v2240
      %v2385 = vpop.f32.mrb[0].mxu0
      %v2386 = vadd.f32 %v2200, %v2385
      %v2387 = vpop.f32.mrb[0].mxu0
      %v2388 = vpop.f32.mrb[0].mxu0
      %v2389 = vadd.f32 %v2200, %v2388
      %v2390 = vpop.f32.mrb[0].mxu0
      %2391 = vmatprep.mubr.bf16.mxu0 0
      %2392 = vmatmul.mubr.bf16.gmra.mrb[0].mxu0 %v2243
      %v2393 = vpop.f32.mrb[0].mxu0
      %v2394 = vadd.f32 %v2200, %v2393
      %v2395 = vpop.f32.mrb[0].mxu0
      %v2396 = vpop.f32.mrb[0].mxu0
      %v2397 = vadd.f32 %v2200, %v2396
      %v2398 = vpop.f32.mrb[0].mxu0
      %2399 = vmatprep.mubr.bf16.mxu0 0
      %2400 = vmatmul.mubr.bf16.gmra.mrb[0].mxu0 %v2246
      %v2401 = vpop.f32.mrb[0].mxu0
      %v2402 = vadd.f32 %v2200, %v2401
      %v2403 = vpop.f32.mrb[0].mxu0
      %v2404 = vpop.f32.mrb[0].mxu0
      %v2405 = vadd.f32 %v2200, %v2404
      %v2406 = vpop.f32.mrb[0].mxu0
      %2407 = vmatprep.mubr.bf16.mxu0 0
      %2408 = vmatmul.mubr.bf16.gmra.mrb[0].mxu0 %v2249
      %v2409 = vpop.f32.mrb[0].mxu0
      %v2410 = vadd.f32 %v2200, %v2409
      %v2411 = vpop.f32.mrb[0].mxu0
      %v2412 = vpop.f32.mrb[0].mxu0
      %v2413 = vadd.f32 %v2200, %v2412
      %v2414 = vpop.f32.mrb[0].mxu0
      %2415 = vdwg.mxu0
      %v2416 = vmax.f32 %v2290, 0.0
      %v2417 = vmax.f32 %v2293, 0.0
      %v2418 = vmax.f32 %v2298, 0.0
      %v2419 = vmax.f32 %v2301, 0.0
      %v2420 = vmax.f32 %v2306, 0.0
      %v2421 = vmax.f32 %v2309, 0.0
      %v2422 = vmax.f32 %v2314, 0.0
      %v2423 = vmax.f32 %v2317, 0.0
      %v2424 = vmax.f32 %v2322, 0.0
      %v2425 = vmax.f32 %v2325, 0.0
      %v2426 = vmax.f32 %v2330, 0.0
      %v2427 = vmax.f32 %v2333, 0.0
      %v2428 = vmax.f32 %v2338, 0.0
      %v2429 = vmax.f32 %v2341, 0.0
      %v2430 = vmax.f32 %v2346, 0.0
      %v2431 = vmax.f32 %v2349, 0.0
      %v2432 = vmax.f32 %v2354, 0.0
      %v2433 = vmax.f32 %v2357, 0.0
      %v2434 = vmax.f32 %v2362, 0.0
      %v2435 = vmax.f32 %v2365, 0.0
      %v2436 = vmax.f32 %v2370, 0.0
      %v2437 = vmax.f32 %v2373, 0.0
      %v2438 = vmax.f32 %v2378, 0.0
      %v2439 = vmax.f32 %v2381, 0.0
      %v2440 = vmax.f32 %v2386, 0.0
      %v2441 = vmax.f32 %v2389, 0.0
      %v2442 = vmax.f32 %v2394, 0.0
      %v2443 = vmax.f32 %v2397, 0.0
      %v2444 = vmax.f32 %v2402, 0.0
      %v2445 = vmax.f32 %v2405, 0.0
      %v2446 = vmax.f32 %v2410, 0.0
      %v2447 = vmax.f32 %v2413, 0.0
      %vm2480 = vcmask 1040384
      %v2481 = vrot.slane %v2416, 7
      %v2482 = vrot.slane %v2417, 7
      %v2483 = vsel %vm2480, %v2481, %v2482
      %v2484 = vrot.slane %v2418, 7
      %v2485 = vrot.slane %v2419, 7
      %v2486 = vsel %vm2480, %v2484, %v2485
      %v2487 = vrot.slane %v2420, 7
      %v2488 = vrot.slane %v2421, 7
      %v2489 = vsel %vm2480, %v2487, %v2488
      %v2490 = vrot.slane %v2422, 7
      %v2491 = vrot.slane %v2423, 7
      %v2492 = vsel %vm2480, %v2490, %v2491
      %v2493 = vrot.slane %v2424, 7
      %v2494 = vrot.slane %v2425, 7
      %v2495 = vsel %vm2480, %v2493, %v2494
      %v2496 = vrot.slane %v2426, 7
      %v2497 = vrot.slane %v2427, 7
      %v2498 = vsel %vm2480, %v2496, %v2497
      %v2499 = vrot.slane %v2428, 7
      %v2500 = vrot.slane %v2429, 7
      %v2501 = vsel %vm2480, %v2499, %v2500
      %v2502 = vrot.slane %v2430, 7
      %v2503 = vrot.slane %v2431, 7
      %v2504 = vsel %vm2480, %v2502, %v2503
      %v2505 = vrot.slane %v2432, 7
      %v2506 = vrot.slane %v2433, 7
      %v2507 = vsel %vm2480, %v2505, %v2506
      %v2508 = vrot.slane %v2434, 7
      %v2509 = vrot.slane %v2435, 7
      %v2510 = vsel %vm2480, %v2508, %v2509
      %v2511 = vrot.slane %v2436, 7
      %v2512 = vrot.slane %v2437, 7
      %v2513 = vsel %vm2480, %v2511, %v2512
      %v2514 = vrot.slane %v2438, 7
      %v2515 = vrot.slane %v2439, 7
      %v2516 = vsel %vm2480, %v2514, %v2515
      %v2517 = vrot.slane %v2440, 7
      %v2518 = vrot.slane %v2441, 7
      %v2519 = vsel %vm2480, %v2517, %v2518
      %v2520 = vrot.slane %v2442, 7
      %v2521 = vrot.slane %v2443, 7
      %v2522 = vsel %vm2480, %v2520, %v2521
      %v2523 = vrot.slane %v2444, 7
      %v2524 = vrot.slane %v2445, 7
      %v2525 = vsel %vm2480, %v2523, %v2524
      %v2526 = vrot.slane %v2446, 7
      %v2527 = vrot.slane %v2447, 7
      %v2528 = vsel %vm2480, %v2526, %v2527
      %v2577 = vsel %vm2480, 0.0, %v2481
      %v2578 = vsel %vm2480, 0.0, %v2484
      %v2579 = vsel %vm2480, 0.0, %v2487
      %v2580 = vsel %vm2480, 0.0, %v2490
      %v2581 = vsel %vm2480, 0.0, %v2493
      %v2582 = vsel %vm2480, 0.0, %v2496
      %v2583 = vsel %vm2480, 0.0, %v2499
      %v2584 = vsel %vm2480, 0.0, %v2502
      %v2585 = vsel %vm2480, 0.0, %v2505
      %v2586 = vsel %vm2480, 0.0, %v2508
      %v2587 = vsel %vm2480, 0.0, %v2511
      %v2588 = vsel %vm2480, 0.0, %v2514
      %v2589 = vsel %vm2480, 0.0, %v2517
      %v2590 = vsel %vm2480, 0.0, %v2520
      %v2591 = vsel %vm2480, 0.0, %v2523
      %v2592 = vsel %vm2480, 0.0, %v2526
      %v2593 = vsel %vm2480, %v2482, 0.0
      %v2594 = vsel %vm2480, %v2485, 0.0
      %v2595 = vsel %vm2480, %v2488, 0.0
      %v2596 = vsel %vm2480, %v2491, 0.0
      %v2597 = vsel %vm2480, %v2494, 0.0
      %v2598 = vsel %vm2480, %v2497, 0.0
      %v2599 = vsel %vm2480, %v2500, 0.0
      %v2600 = vsel %vm2480, %v2503, 0.0
      %v2601 = vsel %vm2480, %v2506, 0.0
      %v2602 = vsel %vm2480, %v2509, 0.0
      %v2603 = vsel %vm2480, %v2512, 0.0
      %v2604 = vsel %vm2480, %v2515, 0.0
      %v2605 = vsel %vm2480, %v2518, 0.0
      %v2606 = vsel %vm2480, %v2521, 0.0
      %v2607 = vsel %vm2480, %v2524, 0.0
      %v2608 = vsel %vm2480, %v2527, 0.0
      %s2609 = scalar_lea.vmem %s197, 24
      %2610 = vst.msk [vmem:[%s2609] sm:$0xff] %vm495, %v2577
      %2611 = vst.msk [vmem:[%s2609 + $0x8] sm:$0xff] %vm495, %v2483
      %2612 = vst.msk [vmem:[%s2609 + $0x10] sm:$0x3] %vm498, %v2593
      %2613 = vst.msk [vmem:[%s2609 + $0x18] sm:$0xff] %vm495, %v2578
      %2614 = vst.msk [vmem:[%s2609 + $0x20] sm:$0xff] %vm495, %v2486
      %2615 = vst.msk [vmem:[%s2609 + $0x28] sm:$0x3] %vm498, %v2594
      %2616 = vst.msk [vmem:[%s2609 + $0x30] sm:$0xff] %vm495, %v2579
      %2617 = vst.msk [vmem:[%s2609 + $0x38] sm:$0xff] %vm495, %v2489
      %2618 = vst.msk [vmem:[%s2609 + $0x40] sm:$0x3] %vm498, %v2595
      %2619 = vst.msk [vmem:[%s2609 + $0x48] sm:$0xff] %vm495, %v2580
      %2620 = vst.msk [vmem:[%s2609 + $0x50] sm:$0xff] %vm495, %v2492
      %2621 = vst.msk [vmem:[%s2609 + $0x58] sm:$0x3] %vm498, %v2596
      %2622 = vst.msk [vmem:[%s2609 + $0x60] sm:$0xff] %vm495, %v2581
      %2623 = vst.msk [vmem:[%s2609 + $0x68] sm:$0xff] %vm495, %v2495
      %2624 = vst.msk [vmem:[%s2609 + $0x70] sm:$0x3] %vm498, %v2597
      %2625 = vst.msk [vmem:[%s2609 + $0x78] sm:$0xff] %vm495, %v2582
      %2626 = vst.msk [vmem:[%s2609 + $0x80] sm:$0xff] %vm495, %v2498
      %2627 = vst.msk [vmem:[%s2609 + $0x88] sm:$0x3] %vm498, %v2598
      %2628 = vst.msk [vmem:[%s2609 + $0x90] sm:$0xff] %vm495, %v2583
      %2629 = vst.msk [vmem:[%s2609 + $0x98] sm:$0xff] %vm495, %v2501
      %2630 = vst.msk [vmem:[%s2609 + $0xa0] sm:$0x3] %vm498, %v2599
      %2631 = vst.msk [vmem:[%s2609 + $0xa8] sm:$0xff] %vm495, %v2584
      %2632 = vst.msk [vmem:[%s2609 + $0xb0] sm:$0xff] %vm495, %v2504
      %2633 = vst.msk [vmem:[%s2609 + $0xb8] sm:$0x3] %vm498, %v2600
      %2634 = vst.msk [vmem:[%s2609 + $0xc0] sm:$0xff] %vm495, %v2585
      %2635 = vst.msk [vmem:[%s2609 + $0xc8] sm:$0xff] %vm495, %v2507
      %2636 = vst.msk [vmem:[%s2609 + $0xd0] sm:$0x3] %vm498, %v2601
      %2637 = vst.msk [vmem:[%s2609 + $0xd8] sm:$0xff] %vm495, %v2586
      %2638 = vst.msk [vmem:[%s2609 + $0xe0] sm:$0xff] %vm495, %v2510
      %2639 = vst.msk [vmem:[%s2609 + $0xe8] sm:$0x3] %vm498, %v2602
      %2640 = vst.msk [vmem:[%s2609 + $0xf0] sm:$0xff] %vm495, %v2587
      %2641 = vst.msk [vmem:[%s2609 + $0xf8] sm:$0xff] %vm495, %v2513
      %2642 = vst.msk [vmem:[%s2609 + $0x100] sm:$0x3] %vm498, %v2603
      %2643 = vst.msk [vmem:[%s2609 + $0x108] sm:$0xff] %vm495, %v2588
      %2644 = vst.msk [vmem:[%s2609 + $0x110] sm:$0xff] %vm495, %v2516
      %2645 = vst.msk [vmem:[%s2609 + $0x118] sm:$0x3] %vm498, %v2604
      %2646 = vst.msk [vmem:[%s2609 + $0x120] sm:$0xff] %vm495, %v2589
      %2647 = vst.msk [vmem:[%s2609 + $0x128] sm:$0xff] %vm495, %v2519
      %2648 = vst.msk [vmem:[%s2609 + $0x130] sm:$0x3] %vm498, %v2605
      %2649 = vst.msk [vmem:[%s2609 + $0x138] sm:$0xff] %vm495, %v2590
      %2650 = vst.msk [vmem:[%s2609 + $0x140] sm:$0xff] %vm495, %v2522
      %2651 = vst.msk [vmem:[%s2609 + $0x148] sm:$0x3] %vm498, %v2606
      %2652 = vst.msk [vmem:[%s2609 + $0x150] sm:$0xff] %vm495, %v2591
      %2653 = vst.msk [vmem:[%s2609 + $0x158] sm:$0xff] %vm495, %v2525
      %2654 = vst.msk [vmem:[%s2609 + $0x160] sm:$0x3] %vm498, %v2607
      %2655 = vst.msk [vmem:[%s2609 + $0x168] sm:$0xff] %vm495, %v2592
      %2656 = vst.msk [vmem:[%s2609 + $0x170] sm:$0xff] %vm495, %v2528
      %2657 = vst.msk [vmem:[%s2609 + $0x178] sm:$0x3] %vm498, %v2608
      %p2658 = scmp.lt.s32.totalorder %s15, 1
      %s2659 = scalar_select %p2658, %s15, 1
      %s2660 = smul.addr %s2659, 54
      %s2661 = smul.addr %s2660, 8
      %s2662 = scalar_lea.vmem %s4, %s2661
      // Predicated region
      $region37: #{tpu_custom_call.1} parent=35 // pred_check
        %p2663 = pneg %p122
      $region38: #{tpu_custom_call.1} parent=35 // pred_check_branch
        %2665 = sbr.rel (%p2663) target = $region40
      $region39: #{tpu_custom_call.1} parent=35 // pred_region
        _
      $region40: #{tpu_custom_call.1} parent=35 // pred_fallthru
        _
    $region36: #{tpu_custom_call.1} parent=5 // pred_fallthru
      _
    %p2666 = scmp.le.s32.totalorder 2, %s10
    // Predicated region
    $region41: #{tpu_custom_call.1} parent=5 // pred_check
      %p2667 = pneg %p2666
    $region42: #{tpu_custom_call.1} parent=5 // pred_check_branch
      %2669 = sbr.rel (%p2667) target = $region44
    $region43: #{tpu_custom_call.1} parent=5 // pred_region
      %s2670 = ssub.s32 %s10, 2
      // Predicated region
      $region45: #{tpu_custom_call.1} parent=43 // pred_check
        %p2671 = pneg %p128
      $region46: #{tpu_custom_call.1} parent=43 // pred_check_branch
        %2673 = sbr.rel (%p2671) target = $region48
      $region47: #{tpu_custom_call.1} parent=43 // pred_region
        %p2674 = scmp.lt.s32.totalorder %s16, 1
        %s2675 = scalar_select %p2674, %s16, 1
        %s2676 = smul.addr %s2675, 54
        %s2677 = smul.addr %s2676, 8
        %s2678 = scalar_lea.vmem %s4, %s2677
      $region48: #{tpu_custom_call.1} parent=43 // pred_fallthru
        _
    $region44: #{tpu_custom_call.1} parent=5 // pred_fallthru
      _
  $region6: #{tpu_custom_call.1} parent=0 // loop_footer
    %s14 = sadd.s32 1, %s10
  $region7: #{tpu_custom_call.1} parent=0 // loop_footer_branch
    %9 = sbr.rel target = $region3
  $region8: #{tpu_custom_call.1} parent=0 // loop_exit
    _

</llo_original>
